<compile_context>
chip_gen: v7x
topology: tpu7x:2x2x1
jax: 0.10.0
libtpu: 0.0.40
codegen_flags: <defaults>
</compile_context>

<pallas_src>
import functools
import math

import jax
import jax.numpy as jnp
from jax.experimental import pallas as pl
from jax.experimental.pallas import tpu as pltpu


def _attn_pool_kernel(tokens_ref, pos_cls_ref, pos_seq_ref, sel_ref, selt_ref,
                      wq_ref, bq_ref, wk_ref, bk_ref, wv_ref, bv_ref,
                      wc_ref, bc_ref, out_ref, *, num_heads, approx_recip):
    B, HW, D = tokens_ref.shape
    Hp = sel_ref.shape[-1]                     # padded head count (>= num_heads)
    hd = D // num_heads
    scale = 1.0 / math.sqrt(hd)
    cdt = wq_ref.dtype                         # compute dtype of the big matmuls

    # Mean (CLS) token + positional embeddings, in f32.
    x = tokens_ref[...].astype(jnp.float32)                       # (B, HW, D)
    x_cls = jnp.mean(x, axis=1) + pos_cls_ref[...]                # (B, D)
    x_seq = x + pos_seq_ref[...][None, :, :]                      # (B, HW, D)
    x_seq_flat = x_seq.reshape(B * HW, D)                         # free: HW % 8 == 0

    xc = x_cls.astype(cdt)
    xs = x_seq_flat.astype(cdt)

    # Projections: big (B*HW, D) matmuls for the sequence K/V, (B, D) matmuls for
    # the CLS q/k/v path; f32 accumulation on the MXU.
    q = (jnp.dot(xc, wq_ref[...], preferred_element_type=jnp.float32)
         + bq_ref[...]) * scale                                   # (B, D)
    k_cls = jnp.dot(xc, wk_ref[...], preferred_element_type=jnp.float32) + bk_ref[...]
    v_cls = jnp.dot(xc, wv_ref[...], preferred_element_type=jnp.float32) + bv_ref[...]
    k_seq = jnp.dot(xs, wk_ref[...], preferred_element_type=jnp.float32) + bk_ref[...]
    v_seq = jnp.dot(xs, wv_ref[...], preferred_element_type=jnp.float32) + bv_ref[...]

    k_seq3 = k_seq.reshape(B, HW, D)
    v_seq3 = v_seq.reshape(B, HW, D)

    sel = sel_ref[...]                                            # (D, Hp) one-hot
    selt = selt_ref[...]                                          # (Hp, D)

    # Head-batched scores: elementwise q*k, then one matmul against the one-hot
    # head selector reduces the per-head lanes (replaces the per-head masked loop).
    e_seq = (q[:, None, :] * k_seq3).reshape(B * HW, D)
    s_seq = jnp.dot(e_seq, sel, preferred_element_type=jnp.float32)
    s_seq = s_seq.reshape(B, HW, Hp)                              # (B, HW, Hp)
    s_cls = jnp.dot(q * k_cls, sel, preferred_element_type=jnp.float32)
    s_cls = s_cls[:, None, :]                                     # (B, 1, Hp)

    # Numerically stable softmax over the (CLS + sequence) keys, all heads at once.
    m = jnp.maximum(jnp.max(s_seq, axis=1, keepdims=True), s_cls)  # (B, 1, Hp)
    p_seq = jnp.exp(s_seq - m)
    p_cls = jnp.exp(s_cls - m)
    denom = p_cls + jnp.sum(p_seq, axis=1, keepdims=True)
    inv = pl.reciprocal(denom, approx=approx_recip)                # EUP on fast path
    pn_seq = p_seq * inv                                           # (B, HW, Hp)
    pn_cls = (p_cls * inv).reshape(B, Hp)                          # (B, Hp)

    # Expand normalized probs back to D lanes (selector transpose) and reduce p*v.
    pf_seq = jnp.dot(pn_seq.reshape(B * HW, Hp), selt,
                     preferred_element_type=jnp.float32).reshape(B, HW, D)
    pf_cls = jnp.dot(pn_cls, selt, preferred_element_type=jnp.float32)   # (B, D)
    attn = jnp.sum(pf_seq * v_seq3, axis=1) + pf_cls * v_cls             # (B, D)

    # Output projection (lane-dense, zero-padded Do).
    out = (jnp.dot(attn.astype(cdt), wc_ref[...],
                   preferred_element_type=jnp.float32) + bc_ref[...])
    out_ref[...] = out.astype(out_ref.dtype)


def attention_pool_2d(x, pos, wq, bq, wk, bk, wv, bv, wc, bc, num_heads, *,
                      compute_dtype=jnp.bfloat16):
    """x: (N, C, H, W) float32.  Returns (N, output_dim)."""
    N, C, H, W = x.shape
    HW = H * W
    D = C
    Do = wc.shape[0]
    assert D % num_heads == 0

    # ---- glue (host / XLA side) ------------------------------------------
    tokens = x.reshape(N, C, HW).transpose(0, 2, 1).astype(jnp.float32)   # (N, HW, D)

    pos_cls = pos[:1].astype(jnp.float32)                                 # (1, D)
    pos_seq = pos[1:].astype(jnp.float32)                                 # (HW, D)

    cdt = compute_dtype
    wq_t = wq.T.astype(cdt)
    wk_t = wk.T.astype(cdt)
    wv_t = wv.T.astype(cdt)

    # Lane-dense output: pad the output projection to a multiple of 128 lanes so
    # the per-step store is an unmasked full-lane vst.  Padded columns are zero.
    Do_pad = max(128, ((Do + 127) // 128) * 128)
    wc_t = jnp.zeros((D, Do_pad), cdt).at[:, :Do].set(wc.T.astype(cdt))
    bc_p = jnp.zeros((1, Do_pad), jnp.float32).at[:, :Do].set(bc.reshape(1, Do))

    bq2 = bq.reshape(1, D).astype(jnp.float32)
    bk2 = bk.reshape(1, D).astype(jnp.float32)
    bv2 = bv.reshape(1, D).astype(jnp.float32)

    # One-hot head selector (hoisted out of the kernel; replaces per-head masks).
    # Head dim padded to a multiple of 8 for friendly sublane tiling; padded heads
    # have all-zero selector columns so they contribute nothing.
    hd = D // num_heads
    Hp = max(8, ((num_heads + 7) // 8) * 8)
    head_ids = jnp.arange(D) // hd
    sel = jax.nn.one_hot(head_ids, Hp, dtype=jnp.float32)                 # (D, Hp)
    selt = sel.T                                                          # (Hp, D)

    # ---- batch blocking ---------------------------------------------------
    # Process a block of B batch elements per grid step so the K/V projections
    # have M = B*HW rows (fills the MXU, amortizes ~0.35 us per-step overhead).
    rows_target = 512
    B = max(1, rows_target // max(HW, 1))
    if B >= N:
        B = N                                   # single grid step, full-array block
    else:
        B = max(8, (B // 8) * 8)                # keep the output block sublane-aligned
    n_blocks = -(-N // B)
    N_pad = n_blocks * B
    if N_pad != N:
        tokens = jnp.pad(tokens, ((0, N_pad - N), (0, 0), (0, 0)))

    kernel = functools.partial(_attn_pool_kernel, num_heads=num_heads,
                               approx_recip=(cdt != jnp.float32))

    out = pl.pallas_call(
        kernel,
        out_shape=jax.ShapeDtypeStruct((N_pad, Do_pad), x.dtype),
        grid=(n_blocks,),
        in_specs=[
            pl.BlockSpec((B, HW, D), lambda n: (n, 0, 0)),      # tokens block
            pl.BlockSpec((1, D), lambda n: (0, 0)),             # pos_cls
            pl.BlockSpec((HW, D), lambda n: (0, 0)),            # pos_seq
            pl.BlockSpec((D, Hp), lambda n: (0, 0)),            # head selector
            pl.BlockSpec((Hp, D), lambda n: (0, 0)),            # head selector^T
            pl.BlockSpec((D, D), lambda n: (0, 0)),             # Wq^T
            pl.BlockSpec((1, D), lambda n: (0, 0)),             # bq
            pl.BlockSpec((D, D), lambda n: (0, 0)),             # Wk^T
            pl.BlockSpec((1, D), lambda n: (0, 0)),             # bk
            pl.BlockSpec((D, D), lambda n: (0, 0)),             # Wv^T
            pl.BlockSpec((1, D), lambda n: (0, 0)),             # bv
            pl.BlockSpec((D, Do_pad), lambda n: (0, 0)),        # Wc^T (padded)
            pl.BlockSpec((1, Do_pad), lambda n: (0, 0)),        # bc   (padded)
        ],
        out_specs=pl.BlockSpec((B, Do_pad), lambda n: (n, 0)),
        compiler_params=pltpu.CompilerParams(
            dimension_semantics=("parallel",),
            vmem_limit_bytes=48 * 1024 * 1024,
        ),
    )(tokens, pos_cls, pos_seq, sel, selt,
      wq_t, bq2, wk_t, bk2, wv_t, bv2, wc_t, bc_p)

    return out[:N, :Do]


def reference(x, pos, wq, bq, wk, bk, wv, bv, wc, bc, num_heads):
    """Pure-JAX replica of the PyTorch forward (F.multi_head_attention_forward)."""
    N, C, H, W = x.shape
    HW = H * W
    t = x.reshape(N, C, HW).transpose(2, 0, 1)                    # (HW, N, C)
    t = jnp.concatenate([t.mean(axis=0, keepdims=True), t], axis=0)   # (S, N, C)
    t = t + pos[:, None, :]
    S = HW + 1
    hd = C // num_heads
    q = (t[:1] @ wq.T + bq) * (hd ** -0.5)                        # (1, N, C)
    k = t @ wk.T + bk                                             # (S, N, C)
    v = t @ wv.T + bv
    qh = q.reshape(1, N, num_heads, hd)
    kh = k.reshape(S, N, num_heads, hd)
    vh = v.reshape(S, N, num_heads, hd)
    scores = jnp.einsum('qnhd,snhd->nhqs', qh, kh)                # (N, H, 1, S)
    p = jax.nn.softmax(scores, axis=-1)
    o = jnp.einsum('nhqs,snhd->qnhd', p, vh).reshape(1, N, C)
    out = o @ wc.T + bc                                           # (1, N, Do)
    return out[0]


if __name__ == "__main__":
    N, C, H, W = 2, 32, 4, 4            # embed_dim = C = 32, spacial_dim = H*W = 16
    num_heads = 4
    output_dim = 16
    HW = H * W

    key = jax.random.PRNGKey(0)
    ks = jax.random.split(key, 10)
    x = jax.random.normal(ks[0], (N, C, H, W), jnp.float32)
    pos = jax.random.normal(ks[1], (HW + 1, C), jnp.float32) / (C ** 0.5)
    wq = jax.random.normal(ks[2], (C, C), jnp.float32) * 0.05
    bq = jax.random.normal(ks[3], (C,), jnp.float32) * 0.02
    wk = jax.random.normal(ks[4], (C, C), jnp.float32) * 0.05
    bk = jax.random.normal(ks[5], (C,), jnp.float32) * 0.02
    wv = jax.random.normal(ks[6], (C, C), jnp.float32) * 0.05
    bv = jax.random.normal(ks[7], (C,), jnp.float32) * 0.02
    wc = jax.random.normal(ks[8], (output_dim, C), jnp.float32) * 0.05
    bc = jax.random.normal(ks[9], (output_dim,), jnp.float32) * 0.02

    ref = reference(x, pos, wq, bq, wk, bk, wv, bv, wc, bc, num_heads)

    # f32 compute path: tight check against the pure-JAX reference.
    out_f32 = attention_pool_2d(x, pos, wq, bq, wk, bk, wv, bv, wc, bc,
                                num_heads, compute_dtype=jnp.float32)
    out_f32 = jax.block_until_ready(out_f32)
    assert out_f32.shape == (N, output_dim), out_f32.shape
    assert jnp.allclose(out_f32, ref, atol=1e-4, rtol=1e-4), (out_f32, ref)

    # bf16 compute path (production config: bf16 MXU operands, f32 accum/softmax).
    out_bf16 = attention_pool_2d(x, pos, wq, bq, wk, bk, wv, bv, wc, bc,
                                 num_heads, compute_dtype=jnp.bfloat16)
    out_bf16 = jax.block_until_ready(out_bf16)
    assert out_bf16.shape == (N, output_dim), out_bf16.shape
    assert jnp.allclose(out_bf16, ref, atol=2e-2, rtol=2e-2), (out_bf16, ref)

    print("KERNEL_OK")
</pallas_src>

<mosaic_0001>
module attributes {stable_mosaic.version = 11 : i64} {
  func.func @_attn_pool_kernel(%arg0: i32, %arg1: memref<2x16x32xf32, #tpu.memory_space<vmem>>, %arg2: memref<1x32xf32, #tpu.memory_space<vmem>>, %arg3: memref<16x32xf32, #tpu.memory_space<vmem>>, %arg4: memref<32x8xf32, #tpu.memory_space<vmem>>, %arg5: memref<8x32xf32, #tpu.memory_space<vmem>>, %arg6: memref<32x32xf32, #tpu.memory_space<vmem>>, %arg7: memref<1x32xf32, #tpu.memory_space<vmem>>, %arg8: memref<32x32xf32, #tpu.memory_space<vmem>>, %arg9: memref<1x32xf32, #tpu.memory_space<vmem>>, %arg10: memref<32x32xf32, #tpu.memory_space<vmem>>, %arg11: memref<1x32xf32, #tpu.memory_space<vmem>>, %arg12: memref<32x128xf32, #tpu.memory_space<vmem>>, %arg13: memref<1x128xf32, #tpu.memory_space<vmem>>, %arg14: memref<2x128xf32, #tpu.memory_space<vmem>>) attributes {dimension_semantics = [#tpu.dimension_semantics<parallel>], iteration_bounds = array<i64: 1>, scalar_prefetch = 0 : i64, scratch_operands = 0 : i64, tpu.core_type = #tpu.core_type<tc>, window_params = [{transform_indices = @transform_0, window_bounds = array<i64: 2, 16, 32>}, {pipeline_mode = #tpu.pipeline_mode<synchronous>, transform_indices = @transform_1, window_bounds = array<i64: 1, 32>}, {pipeline_mode = #tpu.pipeline_mode<synchronous>, transform_indices = @transform_2, window_bounds = array<i64: 16, 32>}, {pipeline_mode = #tpu.pipeline_mode<synchronous>, transform_indices = @transform_3, window_bounds = array<i64: 32, 8>}, {pipeline_mode = #tpu.pipeline_mode<synchronous>, transform_indices = @transform_4, window_bounds = array<i64: 8, 32>}, {pipeline_mode = #tpu.pipeline_mode<synchronous>, transform_indices = @transform_5, window_bounds = array<i64: 32, 32>}, {pipeline_mode = #tpu.pipeline_mode<synchronous>, transform_indices = @transform_6, window_bounds = array<i64: 1, 32>}, {pipeline_mode = #tpu.pipeline_mode<synchronous>, transform_indices = @transform_7, window_bounds = array<i64: 32, 32>}, {pipeline_mode = #tpu.pipeline_mode<synchronous>, transform_indices = @transform_8, window_bounds = array<i64: 1, 32>}, {pipeline_mode = #tpu.pipeline_mode<synchronous>, transform_indices = @transform_9, window_bounds = array<i64: 32, 32>}, {pipeline_mode = #tpu.pipeline_mode<synchronous>, transform_indices = @transform_10, window_bounds = array<i64: 1, 32>}, {pipeline_mode = #tpu.pipeline_mode<synchronous>, transform_indices = @transform_11, window_bounds = array<i64: 32, 128>}, {pipeline_mode = #tpu.pipeline_mode<synchronous>, transform_indices = @transform_12, window_bounds = array<i64: 1, 128>}, {transform_indices = @transform_13, window_bounds = array<i64: 2, 128>}]} {
    %c0 = arith.constant 0 : index
    %c0_0 = arith.constant 0 : index
    %c0_1 = arith.constant 0 : index
    %0 = vector.load %arg1[%c0, %c0_0, %c0_1] : memref<2x16x32xf32, #tpu.memory_space<vmem>>, vector<2x16x32xf32>
    %cst = arith.constant dense<0.000000e+00> : vector<2x32xf32>
    %1 = vector.multi_reduction <add>, %0, %cst [1] : vector<2x16x32xf32> to vector<2x32xf32>
    %cst_2 = arith.constant 1.600000e+01 : f32
    %2 = vector.broadcast %cst_2 : f32 to vector<2x32xf32>
    %3 = arith.divf %1, %2 : vector<2x32xf32>
    %c0_3 = arith.constant 0 : index
    %c0_4 = arith.constant 0 : index
    %4 = vector.load %arg2[%c0_3, %c0_4] : memref<1x32xf32, #tpu.memory_space<vmem>>, vector<1x32xf32>
    %5 = vector.broadcast %4 : vector<1x32xf32> to vector<2x32xf32>
    %6 = arith.addf %3, %5 : vector<2x32xf32>
    %c0_5 = arith.constant 0 : index
    %c0_6 = arith.constant 0 : index
    %7 = vector.load %arg3[%c0_5, %c0_6] : memref<16x32xf32, #tpu.memory_space<vmem>>, vector<16x32xf32>
    %8 = vector.shape_cast %7 : vector<16x32xf32> to vector<1x16x32xf32>
    %9 = vector.broadcast %8 : vector<1x16x32xf32> to vector<2x16x32xf32>
    %10 = arith.addf %0, %9 : vector<2x16x32xf32>
    %11 = vector.shape_cast %10 : vector<2x16x32xf32> to vector<32x32xf32>
    %c0_7 = arith.constant 0 : index
    %c0_8 = arith.constant 0 : index
    %12 = vector.load %arg6[%c0_7, %c0_8] : memref<32x32xf32, #tpu.memory_space<vmem>>, vector<32x32xf32>
    %cst_9 = arith.constant dense<0.000000e+00> : vector<2x32xf32>
    %13 = tpu.matmul %6, %12, %cst_9 {dimension_numbers = #tpu.dot_dimension_numbers<[1], [0], [0], [1], [0, 0, 1, 1], [], []>} : vector<2x32xf32>, vector<32x32xf32>, vector<2x32xf32> -> vector<2x32xf32>
    %c0_10 = arith.constant 0 : index
    %c0_11 = arith.constant 0 : index
    %14 = vector.load %arg7[%c0_10, %c0_11] : memref<1x32xf32, #tpu.memory_space<vmem>>, vector<1x32xf32>
    %15 = vector.broadcast %14 : vector<1x32xf32> to vector<2x32xf32>
    %16 = arith.addf %13, %15 : vector<2x32xf32>
    %cst_12 = arith.constant 0.353553385 : f32
    %17 = vector.broadcast %cst_12 : f32 to vector<2x32xf32>
    %18 = arith.mulf %16, %17 : vector<2x32xf32>
    %c0_13 = arith.constant 0 : index
    %c0_14 = arith.constant 0 : index
    %19 = vector.load %arg8[%c0_13, %c0_14] : memref<32x32xf32, #tpu.memory_space<vmem>>, vector<32x32xf32>
    %cst_15 = arith.constant dense<0.000000e+00> : vector<2x32xf32>
    %20 = tpu.matmul %6, %19, %cst_15 {dimension_numbers = #tpu.dot_dimension_numbers<[1], [0], [0], [1], [0, 0, 1, 1], [], []>} : vector<2x32xf32>, vector<32x32xf32>, vector<2x32xf32> -> vector<2x32xf32>
    %c0_16 = arith.constant 0 : index
    %c0_17 = arith.constant 0 : index
    %21 = vector.load %arg9[%c0_16, %c0_17] : memref<1x32xf32, #tpu.memory_space<vmem>>, vector<1x32xf32>
    %22 = vector.broadcast %21 : vector<1x32xf32> to vector<2x32xf32>
    %23 = arith.addf %20, %22 : vector<2x32xf32>
    %c0_18 = arith.constant 0 : index
    %c0_19 = arith.constant 0 : index
    %24 = vector.load %arg10[%c0_18, %c0_19] : memref<32x32xf32, #tpu.memory_space<vmem>>, vector<32x32xf32>
    %cst_20 = arith.constant dense<0.000000e+00> : vector<2x32xf32>
    %25 = tpu.matmul %6, %24, %cst_20 {dimension_numbers = #tpu.dot_dimension_numbers<[1], [0], [0], [1], [0, 0, 1, 1], [], []>} : vector<2x32xf32>, vector<32x32xf32>, vector<2x32xf32> -> vector<2x32xf32>
    %c0_21 = arith.constant 0 : index
    %c0_22 = arith.constant 0 : index
    %26 = vector.load %arg11[%c0_21, %c0_22] : memref<1x32xf32, #tpu.memory_space<vmem>>, vector<1x32xf32>
    %27 = vector.broadcast %26 : vector<1x32xf32> to vector<2x32xf32>
    %28 = arith.addf %25, %27 : vector<2x32xf32>
    %c0_23 = arith.constant 0 : index
    %c0_24 = arith.constant 0 : index
    %29 = vector.load %arg8[%c0_23, %c0_24] : memref<32x32xf32, #tpu.memory_space<vmem>>, vector<32x32xf32>
    %cst_25 = arith.constant dense<0.000000e+00> : vector<32x32xf32>
    %30 = tpu.matmul %11, %29, %cst_25 {dimension_numbers = #tpu.dot_dimension_numbers<[1], [0], [0], [1], [0, 0, 1, 1], [], []>} : vector<32x32xf32>, vector<32x32xf32>, vector<32x32xf32> -> vector<32x32xf32>
    %c0_26 = arith.constant 0 : index
    %c0_27 = arith.constant 0 : index
    %31 = vector.load %arg9[%c0_26, %c0_27] : memref<1x32xf32, #tpu.memory_space<vmem>>, vector<1x32xf32>
    %32 = vector.broadcast %31 : vector<1x32xf32> to vector<32x32xf32>
    %33 = arith.addf %30, %32 : vector<32x32xf32>
    %c0_28 = arith.constant 0 : index
    %c0_29 = arith.constant 0 : index
    %34 = vector.load %arg10[%c0_28, %c0_29] : memref<32x32xf32, #tpu.memory_space<vmem>>, vector<32x32xf32>
    %cst_30 = arith.constant dense<0.000000e+00> : vector<32x32xf32>
    %35 = tpu.matmul %11, %34, %cst_30 {dimension_numbers = #tpu.dot_dimension_numbers<[1], [0], [0], [1], [0, 0, 1, 1], [], []>} : vector<32x32xf32>, vector<32x32xf32>, vector<32x32xf32> -> vector<32x32xf32>
    %c0_31 = arith.constant 0 : index
    %c0_32 = arith.constant 0 : index
    %36 = vector.load %arg11[%c0_31, %c0_32] : memref<1x32xf32, #tpu.memory_space<vmem>>, vector<1x32xf32>
    %37 = vector.broadcast %36 : vector<1x32xf32> to vector<32x32xf32>
    %38 = arith.addf %35, %37 : vector<32x32xf32>
    %39 = vector.shape_cast %33 : vector<32x32xf32> to vector<2x16x32xf32>
    %40 = vector.shape_cast %38 : vector<32x32xf32> to vector<2x16x32xf32>
    %c0_33 = arith.constant 0 : index
    %c0_34 = arith.constant 0 : index
    %41 = vector.load %arg4[%c0_33, %c0_34] : memref<32x8xf32, #tpu.memory_space<vmem>>, vector<32x8xf32>
    %c0_35 = arith.constant 0 : index
    %c0_36 = arith.constant 0 : index
    %42 = vector.load %arg5[%c0_35, %c0_36] : memref<8x32xf32, #tpu.memory_space<vmem>>, vector<8x32xf32>
    %43 = vector.shape_cast %18 : vector<2x32xf32> to vector<2x1x32xf32>
    %44 = vector.broadcast %43 : vector<2x1x32xf32> to vector<2x16x32xf32>
    %45 = arith.mulf %44, %39 : vector<2x16x32xf32>
    %46 = vector.shape_cast %45 : vector<2x16x32xf32> to vector<32x32xf32>
    %cst_37 = arith.constant dense<0.000000e+00> : vector<32x8xf32>
    %47 = tpu.matmul %46, %41, %cst_37 {dimension_numbers = #tpu.dot_dimension_numbers<[1], [0], [0], [1], [0, 0, 1, 1], [], []>} : vector<32x32xf32>, vector<32x8xf32>, vector<32x8xf32> -> vector<32x8xf32>
    %48 = vector.shape_cast %47 : vector<32x8xf32> to vector<2x16x8xf32>
    %49 = arith.mulf %18, %23 : vector<2x32xf32>
    %cst_38 = arith.constant dense<0.000000e+00> : vector<2x8xf32>
    %50 = tpu.matmul %49, %41, %cst_38 {dimension_numbers = #tpu.dot_dimension_numbers<[1], [0], [0], [1], [0, 0, 1, 1], [], []>} : vector<2x32xf32>, vector<32x8xf32>, vector<2x8xf32> -> vector<2x8xf32>
    %51 = vector.shape_cast %50 : vector<2x8xf32> to vector<2x1x8xf32>
    %cst_39 = arith.constant dense<0xFF800000> : vector<2x8xf32>
    %52 = vector.multi_reduction <maximumf>, %48, %cst_39 [1] : vector<2x16x8xf32> to vector<2x8xf32>
    %53 = vector.shape_cast %52 : vector<2x8xf32> to vector<2x1x8xf32>
    %54 = arith.maximumf %53, %51 : vector<2x1x8xf32>
    %55 = vector.broadcast %54 : vector<2x1x8xf32> to vector<2x16x8xf32>
    %56 = arith.subf %48, %55 : vector<2x16x8xf32>
    %57 = math.exp %56 : vector<2x16x8xf32>
    %58 = arith.subf %51, %54 : vector<2x1x8xf32>
    %59 = math.exp %58 : vector<2x1x8xf32>
    %cst_40 = arith.constant dense<0.000000e+00> : vector<2x8xf32>
    %60 = vector.multi_reduction <add>, %57, %cst_40 [1] : vector<2x16x8xf32> to vector<2x8xf32>
    %61 = vector.shape_cast %60 : vector<2x8xf32> to vector<2x1x8xf32>
    %62 = arith.addf %59, %61 : vector<2x1x8xf32>
    %63 = tpu.reciprocal %62 : vector<2x1x8xf32> -> vector<2x1x8xf32>
    %64 = vector.broadcast %63 : vector<2x1x8xf32> to vector<2x16x8xf32>
    %65 = arith.mulf %57, %64 : vector<2x16x8xf32>
    %66 = arith.mulf %59, %63 : vector<2x1x8xf32>
    %67 = vector.shape_cast %66 : vector<2x1x8xf32> to vector<2x8xf32>
    %68 = vector.shape_cast %65 : vector<2x16x8xf32> to vector<32x8xf32>
    %cst_41 = arith.constant dense<0.000000e+00> : vector<32x32xf32>
    %69 = tpu.matmul %68, %42, %cst_41 {dimension_numbers = #tpu.dot_dimension_numbers<[1], [0], [0], [1], [0, 0, 1, 1], [], []>} : vector<32x8xf32>, vector<8x32xf32>, vector<32x32xf32> -> vector<32x32xf32>
    %70 = vector.shape_cast %69 : vector<32x32xf32> to vector<2x16x32xf32>
    %cst_42 = arith.constant dense<0.000000e+00> : vector<2x32xf32>
    %71 = tpu.matmul %67, %42, %cst_42 {dimension_numbers = #tpu.dot_dimension_numbers<[1], [0], [0], [1], [0, 0, 1, 1], [], []>} : vector<2x8xf32>, vector<8x32xf32>, vector<2x32xf32> -> vector<2x32xf32>
    %72 = arith.mulf %70, %40 : vector<2x16x32xf32>
    %cst_43 = arith.constant dense<0.000000e+00> : vector<2x32xf32>
    %73 = vector.multi_reduction <add>, %72, %cst_43 [1] : vector<2x16x32xf32> to vector<2x32xf32>
    %74 = arith.mulf %71, %28 : vector<2x32xf32>
    %75 = arith.addf %73, %74 : vector<2x32xf32>
    %c0_44 = arith.constant 0 : index
    %c0_45 = arith.constant 0 : index
    %76 = vector.load %arg12[%c0_44, %c0_45] : memref<32x128xf32, #tpu.memory_space<vmem>>, vector<32x128xf32>
    %cst_46 = arith.constant dense<0.000000e+00> : vector<2x128xf32>
    %77 = tpu.matmul %75, %76, %cst_46 {dimension_numbers = #tpu.dot_dimension_numbers<[1], [0], [0], [1], [0, 0, 1, 1], [], []>} : vector<2x32xf32>, vector<32x128xf32>, vector<2x128xf32> -> vector<2x128xf32>
    %c0_47 = arith.constant 0 : index
    %c0_48 = arith.constant 0 : index
    %78 = vector.load %arg13[%c0_47, %c0_48] : memref<1x128xf32, #tpu.memory_space<vmem>>, vector<1x128xf32>
    %79 = vector.broadcast %78 : vector<1x128xf32> to vector<2x128xf32>
    %80 = arith.addf %77, %79 : vector<2x128xf32>
    %c0_49 = arith.constant 0 : index
    %c0_50 = arith.constant 0 : index
    %81 = vector.load %arg14[%c0_49, %c0_50] : memref<2x128xf32, #tpu.memory_space<vmem>>, vector<2x128xf32>
    tpu.vector_store %arg14[%c0_49, %c0_50], %80 {strides = array<i32>} : memref<2x128xf32, #tpu.memory_space<vmem>>, vector<2x128xf32>,
    return
  }
  func.func @transform_0(%arg0: i32) -> (i32, i32, i32) {
    %c0_i32 = arith.constant 0 : i32
    %c0_i32_0 = arith.constant 0 : i32
    %c0_i32_1 = arith.constant 0 : i32
    return %arg0, %c0_i32, %c0_i32_0 : i32, i32, i32
  }
  func.func @transform_1(%arg0: i32) -> (i32, i32) {
    %c0_i32 = arith.constant 0 : i32
    %c0_i32_0 = arith.constant 0 : i32
    %c0_i32_1 = arith.constant 0 : i32
    return %c0_i32, %c0_i32_0 : i32, i32
  }
  func.func @transform_2(%arg0: i32) -> (i32, i32) {
    %c0_i32 = arith.constant 0 : i32
    %c0_i32_0 = arith.constant 0 : i32
    %c0_i32_1 = arith.constant 0 : i32
    return %c0_i32, %c0_i32_0 : i32, i32
  }
  func.func @transform_3(%arg0: i32) -> (i32, i32) {
    %c0_i32 = arith.constant 0 : i32
    %c0_i32_0 = arith.constant 0 : i32
    %c0_i32_1 = arith.constant 0 : i32
    return %c0_i32, %c0_i32_0 : i32, i32
  }
  func.func @transform_4(%arg0: i32) -> (i32, i32) {
    %c0_i32 = arith.constant 0 : i32
    %c0_i32_0 = arith.constant 0 : i32
    %c0_i32_1 = arith.constant 0 : i32
    return %c0_i32, %c0_i32_0 : i32, i32
  }
  func.func @transform_5(%arg0: i32) -> (i32, i32) {
    %c0_i32 = arith.constant 0 : i32
    %c0_i32_0 = arith.constant 0 : i32
    %c0_i32_1 = arith.constant 0 : i32
    return %c0_i32, %c0_i32_0 : i32, i32
  }
  func.func @transform_6(%arg0: i32) -> (i32, i32) {
    %c0_i32 = arith.constant 0 : i32
    %c0_i32_0 = arith.constant 0 : i32
    %c0_i32_1 = arith.constant 0 : i32
    return %c0_i32, %c0_i32_0 : i32, i32
  }
  func.func @transform_7(%arg0: i32) -> (i32, i32) {
    %c0_i32 = arith.constant 0 : i32
    %c0_i32_0 = arith.constant 0 : i32
    %c0_i32_1 = arith.constant 0 : i32
    return %c0_i32, %c0_i32_0 : i32, i32
  }
  func.func @transform_8(%arg0: i32) -> (i32, i32) {
    %c0_i32 = arith.constant 0 : i32
    %c0_i32_0 = arith.constant 0 : i32
    %c0_i32_1 = arith.constant 0 : i32
    return %c0_i32, %c0_i32_0 : i32, i32
  }
  func.func @transform_9(%arg0: i32) -> (i32, i32) {
    %c0_i32 = arith.constant 0 : i32
    %c0_i32_0 = arith.constant 0 : i32
    %c0_i32_1 = arith.constant 0 : i32
    return %c0_i32, %c0_i32_0 : i32, i32
  }
  func.func @transform_10(%arg0: i32) -> (i32, i32) {
    %c0_i32 = arith.constant 0 : i32
    %c0_i32_0 = arith.constant 0 : i32
    %c0_i32_1 = arith.constant 0 : i32
    return %c0_i32, %c0_i32_0 : i32, i32
  }
  func.func @transform_11(%arg0: i32) -> (i32, i32) {
    %c0_i32 = arith.constant 0 : i32
    %c0_i32_0 = arith.constant 0 : i32
    %c0_i32_1 = arith.constant 0 : i32
    return %c0_i32, %c0_i32_0 : i32, i32
  }
  func.func @transform_12(%arg0: i32) -> (i32, i32) {
    %c0_i32 = arith.constant 0 : i32
    %c0_i32_0 = arith.constant 0 : i32
    %c0_i32_1 = arith.constant 0 : i32
    return %c0_i32, %c0_i32_0 : i32, i32
  }
  func.func @transform_13(%arg0: i32) -> (i32, i32) {
    %c0_i32 = arith.constant 0 : i32
    %c0_i32_0 = arith.constant 0 : i32
    return %arg0, %c0_i32 : i32, i32
  }
}

</mosaic_0001>

<llo_original>
// kernel: tpu_custom_call.1
$region0: #{tpu_custom_call.1}
  #allocation0 [shape = 'u32[]', space=smem, size = 0x4, offset = 0x4, fixed_abs, tag = 'smem constant byte address 0x4 - core index']
  #allocation1 [shape = 'u32[144,128]{1,0:T(1,128)}', space=vmem, size = 0x12000, scoped, tag = 'internal scratch']
  %s0 = inlined_call_operand.vmem [shape: f32[2,16,32], index: 0, kind: input, shape index: {}]
  %s1 = inlined_call_operand.vmem [shape: f32[1,32], index: 1, kind: input, shape index: {}]
  %s2 = inlined_call_operand.hbm [shape: f32[16,32], index: 2, kind: input, shape index: {}]
  %s3 = inlined_call_operand.vmem [shape: f32[32,8], index: 3, kind: input, shape index: {}]
  %s4 = inlined_call_operand.hbm [shape: f32[8,32], index: 4, kind: input, shape index: {}]
  %s5 = inlined_call_operand.hbm [shape: f32[32,32], index: 5, kind: input, shape index: {}]
  %s6 = inlined_call_operand.vmem [shape: f32[1,32], index: 6, kind: input, shape index: {}]
  %s7 = inlined_call_operand.vmem [shape: f32[32,32], index: 7, kind: input, shape index: {}]
  %s8 = inlined_call_operand.vmem [shape: f32[1,32], index: 8, kind: input, shape index: {}]
  %s9 = inlined_call_operand.hbm [shape: f32[32,32], index: 9, kind: input, shape index: {}]
  %s10 = inlined_call_operand.vmem [shape: f32[1,32], index: 10, kind: input, shape index: {}]
  %s11 = inlined_call_operand.hbm [shape: f32[32,128], index: 11, kind: input, shape index: {}]
  %s12 = inlined_call_operand.vmem [shape: f32[1,128], index: 12, kind: input, shape index: {}]
  %s13 = inlined_call_operand.hbm [shape: f32[2,128], index: 13, kind: output, shape index: {}]
  %s14 = sld [smem:[#allocation0]]
  $region82: #{tpu_custom_call.1} parent=0
    _
  %s16 = ssub.s32 1, %s14
  %s17 = scalar_select 0, %s16, %s14
  $region1: #{tpu_custom_call.1} parent=0
    #allocation2 [shape = 'u8[8192]{0}', space=vmem, size = 0x2000, scoped, tag = 'input window, operand 2, single buffered']
    #allocation3 [shape = 's32[1]{0}', space=sflag, size = 0x4, scoped, tag = 'scoped memory for tpu_custom_call.1']
    #allocation4 [shape = 's32[1]{0}', space=sflag, size = 0x4, scoped, tag = 'scoped memory for tpu_custom_call.1']
    #allocation5 [shape = 'u8[4096]{0}', space=vmem, size = 0x1000, scoped, tag = 'input window, operand 4, single buffered']
    #allocation6 [shape = 's32[1]{0}', space=sflag, size = 0x4, scoped, tag = 'scoped memory for tpu_custom_call.1']
    #allocation7 [shape = 'u8[16384]{0}', space=vmem, size = 0x4000, scoped, tag = 'input window, operand 5, single buffered']
    #allocation8 [shape = 'u8[16384]{0}', space=vmem, size = 0x4000, scoped, tag = 'input window, operand 9, single buffered']
    #allocation9 [shape = 's32[1]{0}', space=sflag, size = 0x4, scoped, tag = 'scoped memory for tpu_custom_call.1']
    #allocation10 [shape = 'u8[16384]{0}', space=vmem, size = 0x4000, scoped, tag = 'input window, operand 11, single buffered']
    #allocation11 [shape = 'u8[1024]{0}', space=vmem, size = 0x400, scoped, tag = 'output window, operand 0, single buffered']
    %18 = vsyncpa [#allocation3], 0
    %19 = vsyncpa [#allocation6], 0
    %20 = vsyncpa [#allocation9], 0
    %21 = vsyncpa [#allocation4], 0
    // Predicated region
    $region2: #{tpu_custom_call.1} parent=1 // pred_check
      _
    $region3: #{tpu_custom_call.1} parent=1 // pred_check_branch
      %23 = sbr.rel (0) target = $region5
    $region4: #{tpu_custom_call.1} parent=1 // pred_region
      _
    $region5: #{tpu_custom_call.1} parent=1 // pred_fallthru
      _
    // Predicated region
    $region6: #{tpu_custom_call.1} parent=1 // pred_check
      _
    $region7: #{tpu_custom_call.1} parent=1 // pred_check_branch
      %25 = sbr.rel (0) target = $region9
    $region8: #{tpu_custom_call.1} parent=1 // pred_region
      _
    $region9: #{tpu_custom_call.1} parent=1 // pred_fallthru
      _
    // Predicated region
    $region10: #{tpu_custom_call.1} parent=1 // pred_check
      _
    $region11: #{tpu_custom_call.1} parent=1 // pred_check_branch
      %27 = sbr.rel (0) target = $region13
    $region12: #{tpu_custom_call.1} parent=1 // pred_region
      %s29 = ssub.s32 256, 256
      %30 = vsyncadd [#allocation3], %s29
      %s31 = sshll.u32 [#allocation2], 4
      %s32 = int_to_ptr.vmem [resolvable:$true] %s31
      %37 = dma.hbm_to_vmem [thread:$0]  %s2, 256, %s32, [#allocation3], 128, 128, 8
    $region13: #{tpu_custom_call.1} parent=1 // pred_fallthru
      _
    // Predicated region
    $region14: #{tpu_custom_call.1} parent=1 // pred_check
      _
    $region15: #{tpu_custom_call.1} parent=1 // pred_check_branch
      %39 = sbr.rel (0) target = $region17
    $region16: #{tpu_custom_call.1} parent=1 // pred_region
      _
    $region17: #{tpu_custom_call.1} parent=1 // pred_fallthru
      _
    // Predicated region
    $region18: #{tpu_custom_call.1} parent=1 // pred_check
      _
    $region19: #{tpu_custom_call.1} parent=1 // pred_check_branch
      %41 = sbr.rel (0) target = $region21
    $region20: #{tpu_custom_call.1} parent=1 // pred_region
      %s43 = ssub.s32 128, 128
      %44 = vsyncadd [#allocation6], %s43
      %s46 = sshll.u32 [#allocation5], 4
      %s47 = int_to_ptr.vmem [resolvable:$true] %s46
      %49 = dma.hbm_to_vmem [thread:$0]  %s4, 128, %s47, [#allocation6]
    $region21: #{tpu_custom_call.1} parent=1 // pred_fallthru
      _
    // Predicated region
    $region22: #{tpu_custom_call.1} parent=1 // pred_check
      _
    $region23: #{tpu_custom_call.1} parent=1 // pred_check_branch
      %51 = sbr.rel (0) target = $region25
    $region24: #{tpu_custom_call.1} parent=1 // pred_region
      %s53 = ssub.s32 512, 512
      %54 = vsyncadd [#allocation6], %s53
      %s55 = sshll.u32 [#allocation7], 4
      %s56 = int_to_ptr.vmem [resolvable:$true] %s55
      %61 = dma.hbm_to_vmem [thread:$0]  %s5, 512, %s56, [#allocation6], 128, 128, 8
    $region25: #{tpu_custom_call.1} parent=1 // pred_fallthru
      _
    // Predicated region
    $region26: #{tpu_custom_call.1} parent=1 // pred_check
      _
    $region27: #{tpu_custom_call.1} parent=1 // pred_check_branch
      %63 = sbr.rel (0) target = $region29
    $region28: #{tpu_custom_call.1} parent=1 // pred_region
      _
    $region29: #{tpu_custom_call.1} parent=1 // pred_fallthru
      _
    // Predicated region
    $region30: #{tpu_custom_call.1} parent=1 // pred_check
      _
    $region31: #{tpu_custom_call.1} parent=1 // pred_check_branch
      %65 = sbr.rel (0) target = $region33
    $region32: #{tpu_custom_call.1} parent=1 // pred_region
      _
    $region33: #{tpu_custom_call.1} parent=1 // pred_fallthru
      _
    // Predicated region
    $region34: #{tpu_custom_call.1} parent=1 // pred_check
      _
    $region35: #{tpu_custom_call.1} parent=1 // pred_check_branch
      %67 = sbr.rel (0) target = $region37
    $region36: #{tpu_custom_call.1} parent=1 // pred_region
      _
    $region37: #{tpu_custom_call.1} parent=1 // pred_fallthru
      _
    // Predicated region
    $region38: #{tpu_custom_call.1} parent=1 // pred_check
      _
    $region39: #{tpu_custom_call.1} parent=1 // pred_check_branch
      %69 = sbr.rel (0) target = $region41
    $region40: #{tpu_custom_call.1} parent=1 // pred_region
      %s71 = ssub.s32 512, 512
      %72 = vsyncadd [#allocation9], %s71
      %s73 = sshll.u32 [#allocation8], 4
      %s74 = int_to_ptr.vmem [resolvable:$true] %s73
      %79 = dma.hbm_to_vmem [thread:$0]  %s9, 512, %s74, [#allocation9], 128, 128, 8
    $region41: #{tpu_custom_call.1} parent=1 // pred_fallthru
      _
    // Predicated region
    $region42: #{tpu_custom_call.1} parent=1 // pred_check
      _
    $region43: #{tpu_custom_call.1} parent=1 // pred_check_branch
      %81 = sbr.rel (0) target = $region45
    $region44: #{tpu_custom_call.1} parent=1 // pred_region
      _
    $region45: #{tpu_custom_call.1} parent=1 // pred_fallthru
      _
    // Predicated region
    $region46: #{tpu_custom_call.1} parent=1 // pred_check
      _
    $region47: #{tpu_custom_call.1} parent=1 // pred_check_branch
      %83 = sbr.rel (0) target = $region49
    $region48: #{tpu_custom_call.1} parent=1 // pred_region
      %s85 = ssub.s32 512, 512
      %86 = vsyncadd [#allocation9], %s85
      %s87 = sshll.u32 [#allocation10], 4
      %s88 = int_to_ptr.vmem [resolvable:$true] %s87
      %93 = dma.hbm_to_vmem [thread:$0]  %s11, 512, %s88, [#allocation9], 128, 128, 8
    $region49: #{tpu_custom_call.1} parent=1 // pred_fallthru
      _
    // Predicated region
    $region50: #{tpu_custom_call.1} parent=1 // pred_check
      _
    $region51: #{tpu_custom_call.1} parent=1 // pred_check_branch
      %95 = sbr.rel (0) target = $region53
    $region52: #{tpu_custom_call.1} parent=1 // pred_region
      _
    $region53: #{tpu_custom_call.1} parent=1 // pred_fallthru
      _
    // Predicated region
    $region54: #{tpu_custom_call.1} parent=1 // pred_check
      _
    $region55: #{tpu_custom_call.1} parent=1 // pred_check_branch
      %97 = sbr.rel (0) target = $region57
    $region56: #{tpu_custom_call.1} parent=1 // pred_region
      %98 = dma.done [#allocation3], 256
    $region57: #{tpu_custom_call.1} parent=1 // pred_fallthru
      _
    // Predicated region
    $region58: #{tpu_custom_call.1} parent=1 // pred_check
      _
    $region59: #{tpu_custom_call.1} parent=1 // pred_check_branch
      %100 = sbr.rel (0) target = $region61
    $region60: #{tpu_custom_call.1} parent=1 // pred_region
      %101 = dma.done [#allocation6], 128
    $region61: #{tpu_custom_call.1} parent=1 // pred_fallthru
      _
    // Predicated region
    $region62: #{tpu_custom_call.1} parent=1 // pred_check
      _
    $region63: #{tpu_custom_call.1} parent=1 // pred_check_branch
      %103 = sbr.rel (0) target = $region65
    $region64: #{tpu_custom_call.1} parent=1 // pred_region
      %104 = dma.done [#allocation6], 512
    $region65: #{tpu_custom_call.1} parent=1 // pred_fallthru
      _
    // Predicated region
    $region66: #{tpu_custom_call.1} parent=1 // pred_check
      _
    $region67: #{tpu_custom_call.1} parent=1 // pred_check_branch
      %106 = sbr.rel (0) target = $region69
    $region68: #{tpu_custom_call.1} parent=1 // pred_region
      %107 = dma.done [#allocation9], 512
    $region69: #{tpu_custom_call.1} parent=1 // pred_fallthru
      _
    // Predicated region
    $region70: #{tpu_custom_call.1} parent=1 // pred_check
      _
    $region71: #{tpu_custom_call.1} parent=1 // pred_check_branch
      %109 = sbr.rel (0) target = $region73
    $region72: #{tpu_custom_call.1} parent=1 // pred_region
      %110 = dma.done [#allocation9], 512
    $region73: #{tpu_custom_call.1} parent=1 // pred_fallthru
      _
    %v111 = vld [vmem:[%s0] sm:$0xff]
    %v112 = vld [vmem:[%s0 + $0x8] sm:$0xff]
    %v113 = vld [vmem:[%s0 + $0x10] sm:$0xff]
    %v114 = vld [vmem:[%s0 + $0x18] sm:$0xff]
    %vm115 = vcmask 261120
    %v116 = vsel %vm115, %v111, 0.0
    %v117 = vsel %vm115, %v112, 0.0
    %v118 = vadd.f32 %v116, %v117
    %v119 = vrot.slane %v118, 4
    %v120 = vadd.f32 %v118, %v119
    %v121 = vrot.slane %v120, 2
    %v122 = vadd.f32 %v120, %v121
    %v123 = vrot.slane %v122, 1
    %v124 = vadd.f32 %v122, %v123
    %v125 = vsel %vm115, %v113, 0.0
    %v126 = vsel %vm115, %v114, 0.0
    %v127 = vadd.f32 %v125, %v126
    %v128 = vrot.slane %v127, 4
    %v129 = vadd.f32 %v127, %v128
    %v130 = vrot.slane %v129, 2
    %v131 = vadd.f32 %v129, %v130
    %v132 = vrot.slane %v131, 1
    %v133 = vadd.f32 %v131, %v132
    %v134 = vrcp.pop 16.0
    %v135 = vmul.f32 %v124, %v134
    %v136 = vmul.f32 %v133, %v134
    %v137 = vld [vmem:[%s1] sm:$0x1]
    %v139 = vlaneseq
    %v140 = vshrl.u32 %v139, 7
    %v141 = vsub.s32 0, %v140
    %v142 = vrot.slane %v137, %v141
    %v144 = vadd.f32 %v135, %v142
    %v145 = vadd.f32 %v136, %v142
    %v146 = vld [vmem:[#allocation2] sm:$0xff]
    %v147 = vld [vmem:[#allocation2 + $0x8] sm:$0xff]
    %v148 = vadd.f32 %v111, %v146
    %v149 = vadd.f32 %v112, %v147
    %v150 = vadd.f32 %v113, %v146
    %v151 = vadd.f32 %v114, %v147
    %v152 = vld [vmem:[#allocation7] sm:$0xff]
    %v153 = vld [vmem:[#allocation7 + $0x8] sm:$0xff]
    %v154 = vld [vmem:[#allocation7 + $0x10] sm:$0xff]
    %v155 = vld [vmem:[#allocation7 + $0x18] sm:$0xff]
    %v156 = vld [vmem:[%s6] sm:$0x1]
    %v158 = vlaneseq
    %v159 = vshrl.u32 %v158, 7
    %v160 = vsub.s32 0, %v159
    %v161 = vrot.slane %v156, %v160
    %v165 = vrot.slane %v145, 7
    %vm166 = vcmask 1041409
    %v167 = vsel %vm166, %v165, %v144
    %v168 = vsel %vm115, %v167, 0
    %170 = vmatprep.subr.mxu0 0.0
    %171 = vmatpush1.msra.mxu0 %v152
    %172 = vmatprep.subr.mxu0 0.0
    %173 = vmatpush1.msra.mxu0 %v153
    %174 = vmatprep.subr.mxu0 0.0
    %175 = vmatpush1.msra.mxu0 %v154
    %176 = vmatprep.subr.mxu0 0.0
    %177 = vmatpush1.msra.mxu0 %v155
    %178 = vmatprep.subr.mxu0 0.0
    %179 = vmatpush1.msra.mxu0 0.0
    %180 = vmatprep.subr.mxu0 0.0
    %181 = vmatpush1.msra.mxu0 0.0
    %182 = vmatprep.subr.mxu0 0.0
    %183 = vmatpush1.msra.mxu0 0.0
    %184 = vmatprep.subr.mxu0 0.0
    %185 = vmatpush1.msra.mxu0 0.0
    %186 = vmatprep.subr.mxu0 0.0
    %187 = vmatpush1.msra.mxu0 0.0
    %188 = vmatprep.subr.mxu0 0.0
    %189 = vmatpush1.msra.mxu0 0.0
    %190 = vmatprep.subr.mxu0 0.0
    %191 = vmatpush1.msra.mxu0 0.0
    %192 = vmatprep.subr.mxu0 0.0
    %193 = vmatpush1.msra.mxu0 0.0
    %194 = vmatprep.subr.mxu0 0.0
    %195 = vmatpush1.msra.mxu0 0.0
    %196 = vmatprep.subr.mxu0 0.0
    %197 = vmatpush1.msra.mxu0 0.0
    %198 = vmatprep.subr.mxu0 0.0
    %199 = vmatpush1.msra.mxu0 0.0
    %200 = vmatprep.subr.mxu0 0.0
    %201 = vmatpush1.msra.mxu0 0.0
    %202 = vmatprep.subr.mxu0 0.0
    %203 = vmatpush1.msra.mxu0 0.0
    %204 = vmatprep.subr.mxu0 0.0
    %205 = vmatpush1.msra.mxu0 0.0
    %206 = vmatprep.subr.mxu0 0.0
    %207 = vmatpush1.msra.mxu0 0.0
    %208 = vmatprep.subr.mxu0 0.0
    %209 = vmatpush1.msra.mxu0 0.0
    %210 = vmatprep.subr.mxu0 0.0
    %211 = vmatpush1.msra.mxu0 0.0
    %212 = vmatprep.subr.mxu0 0.0
    %213 = vmatpush1.msra.mxu0 0.0
    %214 = vmatprep.subr.mxu0 0.0
    %215 = vmatpush1.msra.mxu0 0.0
    %216 = vmatprep.subr.mxu0 0.0
    %217 = vmatpush1.msra.mxu0 0.0
    %218 = vmatprep.subr.mxu0 0.0
    %219 = vmatpush1.msra.mxu0 0.0
    %220 = vmatprep.subr.mxu0 0.0
    %221 = vmatpush1.msra.mxu0 0.0
    %222 = vmatprep.subr.mxu0 0.0
    %223 = vmatpush1.msra.mxu0 0.0
    %224 = vmatprep.subr.mxu0 0.0
    %225 = vmatpush1.msra.mxu0 0.0
    %226 = vmatprep.subr.mxu0 0.0
    %227 = vmatpush1.msra.mxu0 0.0
    %228 = vmatprep.subr.mxu0 0.0
    %229 = vmatpush1.msra.mxu0 0.0
    %230 = vmatprep.subr.mxu0 0.0
    %231 = vmatpush1.msra.mxu0 0.0
    %232 = vmatprep.subr.mxu0 0.0
    %233 = vmatpush1.msra.mxu0 0.0
    %234 = vmatprep.mubr.f32.mxu0 0.0
    %235 = vmatmul.mubr.f32.gmra.mrb[0].mxu0 %v168
    %v236 = vpop.f32.mrb[0].mxu0
    %v237 = vadd.f32 %v161, %v236
    %v238 = vpop.f32.mrb[0].mxu0
    %239 = vdwg.mxu0
    %v240 = vmul.f32 %v237, 0.35355338
    %v241 = vld [vmem:[%s7] sm:$0xff]
    %v242 = vld [vmem:[%s7 + $0x8] sm:$0xff]
    %v243 = vld [vmem:[%s7 + $0x10] sm:$0xff]
    %v244 = vld [vmem:[%s7 + $0x18] sm:$0xff]
    %v245 = vld [vmem:[%s8] sm:$0x1]
    %v247 = vlaneseq
    %v248 = vshrl.u32 %v247, 7
    %v249 = vsub.s32 0, %v248
    %v250 = vrot.slane %v245, %v249
    %252 = vmatprep.subr.mxu0 0.0
    %253 = vmatpush1.msra.mxu0 %v241
    %254 = vmatprep.subr.mxu0 0.0
    %255 = vmatpush1.msra.mxu0 %v242
    %256 = vmatprep.subr.mxu0 0.0
    %257 = vmatpush1.msra.mxu0 %v243
    %258 = vmatprep.subr.mxu0 0.0
    %259 = vmatpush1.msra.mxu0 %v244
    %260 = vmatprep.subr.mxu0 0.0
    %261 = vmatpush1.msra.mxu0 0.0
    %262 = vmatprep.subr.mxu0 0.0
    %263 = vmatpush1.msra.mxu0 0.0
    %264 = vmatprep.subr.mxu0 0.0
    %265 = vmatpush1.msra.mxu0 0.0
    %266 = vmatprep.subr.mxu0 0.0
    %267 = vmatpush1.msra.mxu0 0.0
    %268 = vmatprep.subr.mxu0 0.0
    %269 = vmatpush1.msra.mxu0 0.0
    %270 = vmatprep.subr.mxu0 0.0
    %271 = vmatpush1.msra.mxu0 0.0
    %272 = vmatprep.subr.mxu0 0.0
    %273 = vmatpush1.msra.mxu0 0.0
    %274 = vmatprep.subr.mxu0 0.0
    %275 = vmatpush1.msra.mxu0 0.0
    %276 = vmatprep.subr.mxu0 0.0
    %277 = vmatpush1.msra.mxu0 0.0
    %278 = vmatprep.subr.mxu0 0.0
    %279 = vmatpush1.msra.mxu0 0.0
    %280 = vmatprep.subr.mxu0 0.0
    %281 = vmatpush1.msra.mxu0 0.0
    %282 = vmatprep.subr.mxu0 0.0
    %283 = vmatpush1.msra.mxu0 0.0
    %284 = vmatprep.subr.mxu0 0.0
    %285 = vmatpush1.msra.mxu0 0.0
    %286 = vmatprep.subr.mxu0 0.0
    %287 = vmatpush1.msra.mxu0 0.0
    %288 = vmatprep.subr.mxu0 0.0
    %289 = vmatpush1.msra.mxu0 0.0
    %290 = vmatprep.subr.mxu0 0.0
    %291 = vmatpush1.msra.mxu0 0.0
    %292 = vmatprep.subr.mxu0 0.0
    %293 = vmatpush1.msra.mxu0 0.0
    %294 = vmatprep.subr.mxu0 0.0
    %295 = vmatpush1.msra.mxu0 0.0
    %296 = vmatprep.subr.mxu0 0.0
    %297 = vmatpush1.msra.mxu0 0.0
    %298 = vmatprep.subr.mxu0 0.0
    %299 = vmatpush1.msra.mxu0 0.0
    %300 = vmatprep.subr.mxu0 0.0
    %301 = vmatpush1.msra.mxu0 0.0
    %302 = vmatprep.subr.mxu0 0.0
    %303 = vmatpush1.msra.mxu0 0.0
    %304 = vmatprep.subr.mxu0 0.0
    %305 = vmatpush1.msra.mxu0 0.0
    %306 = vmatprep.subr.mxu0 0.0
    %307 = vmatpush1.msra.mxu0 0.0
    %308 = vmatprep.subr.mxu0 0.0
    %309 = vmatpush1.msra.mxu0 0.0
    %310 = vmatprep.subr.mxu0 0.0
    %311 = vmatpush1.msra.mxu0 0.0
    %312 = vmatprep.subr.mxu0 0.0
    %313 = vmatpush1.msra.mxu0 0.0
    %314 = vmatprep.subr.mxu0 0.0
    %315 = vmatpush1.msra.mxu0 0.0
    %316 = vmatprep.mubr.f32.mxu0 0.0
    %317 = vmatmul.mubr.f32.gmra.mrb[0].mxu0 %v168
    %v318 = vpop.f32.mrb[0].mxu0
    %v319 = vadd.f32 %v250, %v318
    %v320 = vpop.f32.mrb[0].mxu0
    %321 = vdwg.mxu0
    %v322 = vld [vmem:[#allocation8] sm:$0xff]
    %v323 = vld [vmem:[#allocation8 + $0x8] sm:$0xff]
    %v324 = vld [vmem:[#allocation8 + $0x10] sm:$0xff]
    %v325 = vld [vmem:[#allocation8 + $0x18] sm:$0xff]
    %v326 = vld [vmem:[%s10] sm:$0x1]
    %v328 = vlaneseq
    %v329 = vshrl.u32 %v328, 7
    %v330 = vsub.s32 0, %v329
    %v331 = vrot.slane %v326, %v330
    %333 = vmatprep.subr.mxu0 0.0
    %334 = vmatpush1.msra.mxu0 %v322
    %335 = vmatprep.subr.mxu0 0.0
    %336 = vmatpush1.msra.mxu0 %v323
    %337 = vmatprep.subr.mxu0 0.0
    %338 = vmatpush1.msra.mxu0 %v324
    %339 = vmatprep.subr.mxu0 0.0
    %340 = vmatpush1.msra.mxu0 %v325
    %341 = vmatprep.subr.mxu0 0.0
    %342 = vmatpush1.msra.mxu0 0.0
    %343 = vmatprep.subr.mxu0 0.0
    %344 = vmatpush1.msra.mxu0 0.0
    %345 = vmatprep.subr.mxu0 0.0
    %346 = vmatpush1.msra.mxu0 0.0
    %347 = vmatprep.subr.mxu0 0.0
    %348 = vmatpush1.msra.mxu0 0.0
    %349 = vmatprep.subr.mxu0 0.0
    %350 = vmatpush1.msra.mxu0 0.0
    %351 = vmatprep.subr.mxu0 0.0
    %352 = vmatpush1.msra.mxu0 0.0
    %353 = vmatprep.subr.mxu0 0.0
    %354 = vmatpush1.msra.mxu0 0.0
    %355 = vmatprep.subr.mxu0 0.0
    %356 = vmatpush1.msra.mxu0 0.0
    %357 = vmatprep.subr.mxu0 0.0
    %358 = vmatpush1.msra.mxu0 0.0
    %359 = vmatprep.subr.mxu0 0.0
    %360 = vmatpush1.msra.mxu0 0.0
    %361 = vmatprep.subr.mxu0 0.0
    %362 = vmatpush1.msra.mxu0 0.0
    %363 = vmatprep.subr.mxu0 0.0
    %364 = vmatpush1.msra.mxu0 0.0
    %365 = vmatprep.subr.mxu0 0.0
    %366 = vmatpush1.msra.mxu0 0.0
    %367 = vmatprep.subr.mxu0 0.0
    %368 = vmatpush1.msra.mxu0 0.0
    %369 = vmatprep.subr.mxu0 0.0
    %370 = vmatpush1.msra.mxu0 0.0
    %371 = vmatprep.subr.mxu0 0.0
    %372 = vmatpush1.msra.mxu0 0.0
    %373 = vmatprep.subr.mxu0 0.0
    %374 = vmatpush1.msra.mxu0 0.0
    %375 = vmatprep.subr.mxu0 0.0
    %376 = vmatpush1.msra.mxu0 0.0
    %377 = vmatprep.subr.mxu0 0.0
    %378 = vmatpush1.msra.mxu0 0.0
    %379 = vmatprep.subr.mxu0 0.0
    %380 = vmatpush1.msra.mxu0 0.0
    %381 = vmatprep.subr.mxu0 0.0
    %382 = vmatpush1.msra.mxu0 0.0
    %383 = vmatprep.subr.mxu0 0.0
    %384 = vmatpush1.msra.mxu0 0.0
    %385 = vmatprep.subr.mxu0 0.0
    %386 = vmatpush1.msra.mxu0 0.0
    %387 = vmatprep.subr.mxu0 0.0
    %388 = vmatpush1.msra.mxu0 0.0
    %389 = vmatprep.subr.mxu0 0.0
    %390 = vmatpush1.msra.mxu0 0.0
    %391 = vmatprep.subr.mxu0 0.0
    %392 = vmatpush1.msra.mxu0 0.0
    %393 = vmatprep.subr.mxu0 0.0
    %394 = vmatpush1.msra.mxu0 0.0
    %395 = vmatprep.subr.mxu0 0.0
    %396 = vmatpush1.msra.mxu0 0.0
    %397 = vmatprep.mubr.f32.mxu0 0.0
    %398 = vmatmul.mubr.f32.gmra.mrb[0].mxu0 %v168
    %v399 = vpop.f32.mrb[0].mxu0
    %v400 = vadd.f32 %v331, %v399
    %v401 = vpop.f32.mrb[0].mxu0
    %402 = vdwg.mxu0
    %v404 = vsel %vm115, %v148, 0
    %v407 = vsel %vm115, %v149, 0
    %v410 = vsel %vm115, %v150, 0
    %v413 = vsel %vm115, %v151, 0
    %415 = vmatprep.subr.mxu0 0.0
    %416 = vmatpush1.msra.mxu0 %v241
    %417 = vmatprep.subr.mxu0 0.0
    %418 = vmatpush1.msra.mxu0 %v242
    %419 = vmatprep.subr.mxu0 0.0
    %420 = vmatpush1.msra.mxu0 %v243
    %421 = vmatprep.subr.mxu0 0.0
    %422 = vmatpush1.msra.mxu0 %v244
    %423 = vmatprep.subr.mxu0 0.0
    %424 = vmatpush1.msra.mxu0 0.0
    %425 = vmatprep.subr.mxu0 0.0
    %426 = vmatpush1.msra.mxu0 0.0
    %427 = vmatprep.subr.mxu0 0.0
    %428 = vmatpush1.msra.mxu0 0.0
    %429 = vmatprep.subr.mxu0 0.0
    %430 = vmatpush1.msra.mxu0 0.0
    %431 = vmatprep.subr.mxu0 0.0
    %432 = vmatpush1.msra.mxu0 0.0
    %433 = vmatprep.subr.mxu0 0.0
    %434 = vmatpush1.msra.mxu0 0.0
    %435 = vmatprep.subr.mxu0 0.0
    %436 = vmatpush1.msra.mxu0 0.0
    %437 = vmatprep.subr.mxu0 0.0
    %438 = vmatpush1.msra.mxu0 0.0
    %439 = vmatprep.subr.mxu0 0.0
    %440 = vmatpush1.msra.mxu0 0.0
    %441 = vmatprep.subr.mxu0 0.0
    %442 = vmatpush1.msra.mxu0 0.0
    %443 = vmatprep.subr.mxu0 0.0
    %444 = vmatpush1.msra.mxu0 0.0
    %445 = vmatprep.subr.mxu0 0.0
    %446 = vmatpush1.msra.mxu0 0.0
    %447 = vmatprep.subr.mxu0 0.0
    %448 = vmatpush1.msra.mxu0 0.0
    %449 = vmatprep.subr.mxu0 0.0
    %450 = vmatpush1.msra.mxu0 0.0
    %451 = vmatprep.subr.mxu0 0.0
    %452 = vmatpush1.msra.mxu0 0.0
    %453 = vmatprep.subr.mxu0 0.0
    %454 = vmatpush1.msra.mxu0 0.0
    %455 = vmatprep.subr.mxu0 0.0
    %456 = vmatpush1.msra.mxu0 0.0
    %457 = vmatprep.subr.mxu0 0.0
    %458 = vmatpush1.msra.mxu0 0.0
    %459 = vmatprep.subr.mxu0 0.0
    %460 = vmatpush1.msra.mxu0 0.0
    %461 = vmatprep.subr.mxu0 0.0
    %462 = vmatpush1.msra.mxu0 0.0
    %463 = vmatprep.subr.mxu0 0.0
    %464 = vmatpush1.msra.mxu0 0.0
    %465 = vmatprep.subr.mxu0 0.0
    %466 = vmatpush1.msra.mxu0 0.0
    %467 = vmatprep.subr.mxu0 0.0
    %468 = vmatpush1.msra.mxu0 0.0
    %469 = vmatprep.subr.mxu0 0.0
    %470 = vmatpush1.msra.mxu0 0.0
    %471 = vmatprep.subr.mxu0 0.0
    %472 = vmatpush1.msra.mxu0 0.0
    %473 = vmatprep.subr.mxu0 0.0
    %474 = vmatpush1.msra.mxu0 0.0
    %475 = vmatprep.subr.mxu0 0.0
    %476 = vmatpush1.msra.mxu0 0.0
    %477 = vmatprep.subr.mxu0 0.0
    %478 = vmatpush1.msra.mxu0 0.0
    %479 = vmatprep.mubr.f32.mxu0 0.0
    %480 = vmatmul.mubr.f32.gmra.mrb[0].mxu0 %v404
    %v481 = vpop.f32.mrb[0].mxu0
    %v482 = vadd.f32 %v250, %v481
    %v483 = vpop.f32.mrb[0].mxu0
    %484 = vmatprep.mubr.f32.mxu0 0.0
    %485 = vmatmul.mubr.f32.gmra.mrb[0].mxu0 %v407
    %v486 = vpop.f32.mrb[0].mxu0
    %v487 = vadd.f32 %v250, %v486
    %v488 = vpop.f32.mrb[0].mxu0
    %489 = vmatprep.mubr.f32.mxu0 0.0
    %490 = vmatmul.mubr.f32.gmra.mrb[0].mxu0 %v410
    %v491 = vpop.f32.mrb[0].mxu0
    %v492 = vadd.f32 %v250, %v491
    %v493 = vpop.f32.mrb[0].mxu0
    %494 = vmatprep.mubr.f32.mxu0 0.0
    %495 = vmatmul.mubr.f32.gmra.mrb[0].mxu0 %v413
    %v496 = vpop.f32.mrb[0].mxu0
    %v497 = vadd.f32 %v250, %v496
    %v498 = vpop.f32.mrb[0].mxu0
    %499 = vdwg.mxu0
    %500 = vmatprep.subr.mxu0 0.0
    %501 = vmatpush1.msra.mxu0 %v322
    %502 = vmatprep.subr.mxu0 0.0
    %503 = vmatpush1.msra.mxu0 %v323
    %504 = vmatprep.subr.mxu0 0.0
    %505 = vmatpush1.msra.mxu0 %v324
    %506 = vmatprep.subr.mxu0 0.0
    %507 = vmatpush1.msra.mxu0 %v325
    %508 = vmatprep.subr.mxu0 0.0
    %509 = vmatpush1.msra.mxu0 0.0
    %510 = vmatprep.subr.mxu0 0.0
    %511 = vmatpush1.msra.mxu0 0.0
    %512 = vmatprep.subr.mxu0 0.0
    %513 = vmatpush1.msra.mxu0 0.0
    %514 = vmatprep.subr.mxu0 0.0
    %515 = vmatpush1.msra.mxu0 0.0
    %516 = vmatprep.subr.mxu0 0.0
    %517 = vmatpush1.msra.mxu0 0.0
    %518 = vmatprep.subr.mxu0 0.0
    %519 = vmatpush1.msra.mxu0 0.0
    %520 = vmatprep.subr.mxu0 0.0
    %521 = vmatpush1.msra.mxu0 0.0
    %522 = vmatprep.subr.mxu0 0.0
    %523 = vmatpush1.msra.mxu0 0.0
    %524 = vmatprep.subr.mxu0 0.0
    %525 = vmatpush1.msra.mxu0 0.0
    %526 = vmatprep.subr.mxu0 0.0
    %527 = vmatpush1.msra.mxu0 0.0
    %528 = vmatprep.subr.mxu0 0.0
    %529 = vmatpush1.msra.mxu0 0.0
    %530 = vmatprep.subr.mxu0 0.0
    %531 = vmatpush1.msra.mxu0 0.0
    %532 = vmatprep.subr.mxu0 0.0
    %533 = vmatpush1.msra.mxu0 0.0
    %534 = vmatprep.subr.mxu0 0.0
    %535 = vmatpush1.msra.mxu0 0.0
    %536 = vmatprep.subr.mxu0 0.0
    %537 = vmatpush1.msra.mxu0 0.0
    %538 = vmatprep.subr.mxu0 0.0
    %539 = vmatpush1.msra.mxu0 0.0
    %540 = vmatprep.subr.mxu0 0.0
    %541 = vmatpush1.msra.mxu0 0.0
    %542 = vmatprep.subr.mxu0 0.0
    %543 = vmatpush1.msra.mxu0 0.0
    %544 = vmatprep.subr.mxu0 0.0
    %545 = vmatpush1.msra.mxu0 0.0
    %546 = vmatprep.subr.mxu0 0.0
    %547 = vmatpush1.msra.mxu0 0.0
    %548 = vmatprep.subr.mxu0 0.0
    %549 = vmatpush1.msra.mxu0 0.0
    %550 = vmatprep.subr.mxu0 0.0
    %551 = vmatpush1.msra.mxu0 0.0
    %552 = vmatprep.subr.mxu0 0.0
    %553 = vmatpush1.msra.mxu0 0.0
    %554 = vmatprep.subr.mxu0 0.0
    %555 = vmatpush1.msra.mxu0 0.0
    %556 = vmatprep.subr.mxu0 0.0
    %557 = vmatpush1.msra.mxu0 0.0
    %558 = vmatprep.subr.mxu0 0.0
    %559 = vmatpush1.msra.mxu0 0.0
    %560 = vmatprep.subr.mxu0 0.0
    %561 = vmatpush1.msra.mxu0 0.0
    %562 = vmatprep.subr.mxu0 0.0
    %563 = vmatpush1.msra.mxu0 0.0
    %564 = vmatprep.mubr.f32.mxu0 0.0
    %565 = vmatmul.mubr.f32.gmra.mrb[0].mxu0 %v404
    %v566 = vpop.f32.mrb[0].mxu0
    %v567 = vadd.f32 %v331, %v566
    %v568 = vpop.f32.mrb[0].mxu0
    %569 = vmatprep.mubr.f32.mxu0 0.0
    %570 = vmatmul.mubr.f32.gmra.mrb[0].mxu0 %v407
    %v571 = vpop.f32.mrb[0].mxu0
    %v572 = vadd.f32 %v331, %v571
    %v573 = vpop.f32.mrb[0].mxu0
    %574 = vmatprep.mubr.f32.mxu0 0.0
    %575 = vmatmul.mubr.f32.gmra.mrb[0].mxu0 %v410
    %v576 = vpop.f32.mrb[0].mxu0
    %v577 = vadd.f32 %v331, %v576
    %v578 = vpop.f32.mrb[0].mxu0
    %579 = vmatprep.mubr.f32.mxu0 0.0
    %580 = vmatmul.mubr.f32.gmra.mrb[0].mxu0 %v413
    %v581 = vpop.f32.mrb[0].mxu0
    %v582 = vadd.f32 %v331, %v581
    %v583 = vpop.f32.mrb[0].mxu0
    %584 = vdwg.mxu0
    %v585 = vld [vmem:[%s3] sm:$0xff]
    %v586 = vld [vmem:[%s3 + $0x8] sm:$0xff]
    %v587 = vld [vmem:[%s3 + $0x10] sm:$0xff]
    %v588 = vld [vmem:[%s3 + $0x18] sm:$0xff]
    %v589 = vld [vmem:[#allocation5] sm:$0xff]
    %v592 = vunpack.c.l.s4 1966171168
    %v593 = vunpack.c.0.s8 %v592
    %v594 = vlaneseq
    %v595 = vshrl.u32 %v594, 7
    %v596 = vsub.s32 %v593, %v595
    %v597 = vrot.slane %v240, %v596
    %v598 = vcombine.high %v597, %v597
    %v600 = vunpack.c.l.s4 1966171168
    %v601 = vunpack.c.0.s8 %v600
    %v602 = vlaneseq
    %v603 = vshrl.u32 %v602, 7
    %v604 = vsub.s32 %v601, %v603
    %v605 = vrot.slane %v597, %v604
    %v607 = vunpack.c.l.s4 1966171168
    %v608 = vunpack.c.0.s8 %v607
    %v609 = vlaneseq
    %v610 = vshrl.u32 %v609, 7
    %v611 = vsub.s32 %v608, %v610
    %v612 = vrot.slane %v598, %v611
    %v613 = vlaneseq
    %v614 = vshrl.u32 %v613, 7
    %v615 = vsub.s32 0, %v614
    %v616 = vrot.slane %v605, %v615
    %v617 = vlaneseq
    %v618 = vshrl.u32 %v617, 7
    %v619 = vsub.s32 0, %v618
    %v620 = vrot.slane %v612, %v619
    %v623 = vmul.f32 %v616, %v482
    %v624 = vmul.f32 %v616, %v487
    %v625 = vmul.f32 %v620, %v492
    %v626 = vmul.f32 %v620, %v497
    %v628 = vsel %vm115, %v623, 0
    %v631 = vsel %vm115, %v624, 0
    %v634 = vsel %vm115, %v625, 0
    %v637 = vsel %vm115, %v626, 0
    %639 = vmatprep.subr.mxu0 0.0
    %640 = vmatpush1.msra.mxu0 %v585
    %641 = vmatprep.subr.mxu0 0.0
    %642 = vmatpush1.msra.mxu0 %v586
    %643 = vmatprep.subr.mxu0 0.0
    %644 = vmatpush1.msra.mxu0 %v587
    %645 = vmatprep.subr.mxu0 0.0
    %646 = vmatpush1.msra.mxu0 %v588
    %647 = vmatprep.subr.mxu0 0.0
    %648 = vmatpush1.msra.mxu0 0.0
    %649 = vmatprep.subr.mxu0 0.0
    %650 = vmatpush1.msra.mxu0 0.0
    %651 = vmatprep.subr.mxu0 0.0
    %652 = vmatpush1.msra.mxu0 0.0
    %653 = vmatprep.subr.mxu0 0.0
    %654 = vmatpush1.msra.mxu0 0.0
    %655 = vmatprep.subr.mxu0 0.0
    %656 = vmatpush1.msra.mxu0 0.0
    %657 = vmatprep.subr.mxu0 0.0
    %658 = vmatpush1.msra.mxu0 0.0
    %659 = vmatprep.subr.mxu0 0.0
    %660 = vmatpush1.msra.mxu0 0.0
    %661 = vmatprep.subr.mxu0 0.0
    %662 = vmatpush1.msra.mxu0 0.0
    %663 = vmatprep.subr.mxu0 0.0
    %664 = vmatpush1.msra.mxu0 0.0
    %665 = vmatprep.subr.mxu0 0.0
    %666 = vmatpush1.msra.mxu0 0.0
    %667 = vmatprep.subr.mxu0 0.0
    %668 = vmatpush1.msra.mxu0 0.0
    %669 = vmatprep.subr.mxu0 0.0
    %670 = vmatpush1.msra.mxu0 0.0
    %671 = vmatprep.subr.mxu0 0.0
    %672 = vmatpush1.msra.mxu0 0.0
    %673 = vmatprep.subr.mxu0 0.0
    %674 = vmatpush1.msra.mxu0 0.0
    %675 = vmatprep.subr.mxu0 0.0
    %676 = vmatpush1.msra.mxu0 0.0
    %677 = vmatprep.subr.mxu0 0.0
    %678 = vmatpush1.msra.mxu0 0.0
    %679 = vmatprep.subr.mxu0 0.0
    %680 = vmatpush1.msra.mxu0 0.0
    %681 = vmatprep.subr.mxu0 0.0
    %682 = vmatpush1.msra.mxu0 0.0
    %683 = vmatprep.subr.mxu0 0.0
    %684 = vmatpush1.msra.mxu0 0.0
    %685 = vmatprep.subr.mxu0 0.0
    %686 = vmatpush1.msra.mxu0 0.0
    %687 = vmatprep.subr.mxu0 0.0
    %688 = vmatpush1.msra.mxu0 0.0
    %689 = vmatprep.subr.mxu0 0.0
    %690 = vmatpush1.msra.mxu0 0.0
    %691 = vmatprep.subr.mxu0 0.0
    %692 = vmatpush1.msra.mxu0 0.0
    %693 = vmatprep.subr.mxu0 0.0
    %694 = vmatpush1.msra.mxu0 0.0
    %695 = vmatprep.subr.mxu0 0.0
    %696 = vmatpush1.msra.mxu0 0.0
    %697 = vmatprep.subr.mxu0 0.0
    %698 = vmatpush1.msra.mxu0 0.0
    %699 = vmatprep.subr.mxu0 0.0
    %700 = vmatpush1.msra.mxu0 0.0
    %701 = vmatprep.subr.mxu0 0.0
    %702 = vmatpush1.msra.mxu0 0.0
    %703 = vmatprep.mubr.f32.mxu0 0.0
    %704 = vmatmul.mubr.f32.gmra.mrb[0].mxu0 %v628
    %v705 = vpop.f32.mrb[0].mxu0
    %v706 = vadd.f32 0.0, %v705
    %v707 = vpop.f32.mrb[0].mxu0
    %708 = vmatprep.mubr.f32.mxu0 0.0
    %709 = vmatmul.mubr.f32.gmra.mrb[0].mxu0 %v631
    %v710 = vpop.f32.mrb[0].mxu0
    %v711 = vadd.f32 0.0, %v710
    %v712 = vpop.f32.mrb[0].mxu0
    %713 = vmatprep.mubr.f32.mxu0 0.0
    %714 = vmatmul.mubr.f32.gmra.mrb[0].mxu0 %v634
    %v715 = vpop.f32.mrb[0].mxu0
    %v716 = vadd.f32 0.0, %v715
    %v717 = vpop.f32.mrb[0].mxu0
    %718 = vmatprep.mubr.f32.mxu0 0.0
    %719 = vmatmul.mubr.f32.gmra.mrb[0].mxu0 %v637
    %v720 = vpop.f32.mrb[0].mxu0
    %v721 = vadd.f32 0.0, %v720
    %v722 = vpop.f32.mrb[0].mxu0
    %723 = vdwg.mxu0
    %v724 = vmul.f32 %v240, %v319
    %v726 = vsel %vm115, %v724, 0
    %728 = vmatprep.subr.mxu0 0.0
    %729 = vmatpush1.msra.mxu0 %v585
    %730 = vmatprep.subr.mxu0 0.0
    %731 = vmatpush1.msra.mxu0 %v586
    %732 = vmatprep.subr.mxu0 0.0
    %733 = vmatpush1.msra.mxu0 %v587
    %734 = vmatprep.subr.mxu0 0.0
    %735 = vmatpush1.msra.mxu0 %v588
    %736 = vmatprep.subr.mxu0 0.0
    %737 = vmatpush1.msra.mxu0 0.0
    %738 = vmatprep.subr.mxu0 0.0
    %739 = vmatpush1.msra.mxu0 0.0
    %740 = vmatprep.subr.mxu0 0.0
    %741 = vmatpush1.msra.mxu0 0.0
    %742 = vmatprep.subr.mxu0 0.0
    %743 = vmatpush1.msra.mxu0 0.0
    %744 = vmatprep.subr.mxu0 0.0
    %745 = vmatpush1.msra.mxu0 0.0
    %746 = vmatprep.subr.mxu0 0.0
    %747 = vmatpush1.msra.mxu0 0.0
    %748 = vmatprep.subr.mxu0 0.0
    %749 = vmatpush1.msra.mxu0 0.0
    %750 = vmatprep.subr.mxu0 0.0
    %751 = vmatpush1.msra.mxu0 0.0
    %752 = vmatprep.subr.mxu0 0.0
    %753 = vmatpush1.msra.mxu0 0.0
    %754 = vmatprep.subr.mxu0 0.0
    %755 = vmatpush1.msra.mxu0 0.0
    %756 = vmatprep.subr.mxu0 0.0
    %757 = vmatpush1.msra.mxu0 0.0
    %758 = vmatprep.subr.mxu0 0.0
    %759 = vmatpush1.msra.mxu0 0.0
    %760 = vmatprep.subr.mxu0 0.0
    %761 = vmatpush1.msra.mxu0 0.0
    %762 = vmatprep.subr.mxu0 0.0
    %763 = vmatpush1.msra.mxu0 0.0
    %764 = vmatprep.subr.mxu0 0.0
    %765 = vmatpush1.msra.mxu0 0.0
    %766 = vmatprep.subr.mxu0 0.0
    %767 = vmatpush1.msra.mxu0 0.0
    %768 = vmatprep.subr.mxu0 0.0
    %769 = vmatpush1.msra.mxu0 0.0
    %770 = vmatprep.subr.mxu0 0.0
    %771 = vmatpush1.msra.mxu0 0.0
    %772 = vmatprep.subr.mxu0 0.0
    %773 = vmatpush1.msra.mxu0 0.0
    %774 = vmatprep.subr.mxu0 0.0
    %775 = vmatpush1.msra.mxu0 0.0
    %776 = vmatprep.subr.mxu0 0.0
    %777 = vmatpush1.msra.mxu0 0.0
    %778 = vmatprep.subr.mxu0 0.0
    %779 = vmatpush1.msra.mxu0 0.0
    %780 = vmatprep.subr.mxu0 0.0
    %781 = vmatpush1.msra.mxu0 0.0
    %782 = vmatprep.subr.mxu0 0.0
    %783 = vmatpush1.msra.mxu0 0.0
    %784 = vmatprep.subr.mxu0 0.0
    %785 = vmatpush1.msra.mxu0 0.0
    %786 = vmatprep.subr.mxu0 0.0
    %787 = vmatpush1.msra.mxu0 0.0
    %788 = vmatprep.subr.mxu0 0.0
    %789 = vmatpush1.msra.mxu0 0.0
    %790 = vmatprep.subr.mxu0 0.0
    %791 = vmatpush1.msra.mxu0 0.0
    %792 = vmatprep.mubr.f32.mxu0 0.0
    %793 = vmatmul.mubr.f32.gmra.mrb[0].mxu0 %v726
    %v794 = vpop.f32.mrb[0].mxu0
    %v795 = vadd.f32 0.0, %v794
    %v796 = vpop.f32.mrb[0].mxu0
    %797 = vdwg.mxu0
    %v800 = vunpack.c.l.s4 1966171168
    %v801 = vunpack.c.0.s8 %v800
    %v802 = vlaneseq
    %v803 = vshrl.u32 %v802, 7
    %v804 = vsub.s32 %v801, %v803
    %v805 = vrot.slane %v795, %v804
    %v806 = vcombine.high %v805, %v805
    %v808 = vunpack.c.l.s4 1966171168
    %v809 = vunpack.c.0.s8 %v808
    %v810 = vlaneseq
    %v811 = vshrl.u32 %v810, 7
    %v812 = vsub.s32 %v809, %v811
    %v813 = vrot.slane %v805, %v812
    %v815 = vunpack.c.l.s4 1966171168
    %v816 = vunpack.c.0.s8 %v815
    %v817 = vlaneseq
    %v818 = vshrl.u32 %v817, 7
    %v819 = vsub.s32 %v816, %v818
    %v820 = vrot.slane %v806, %v819
    %vm823 = vcmask 64512
    %v824 = vsel %vm823, %v706, -inf
    %v825 = vsel %vm823, %v711, -inf
    %v826 = vmax.f32 %v824, %v825
    %v827 = vrot.slane %v826, 4
    %v828 = vmax.f32 %v826, %v827
    %v829 = vrot.slane %v828, 2
    %v830 = vmax.f32 %v828, %v829
    %v831 = vrot.slane %v830, 1
    %v832 = vmax.f32 %v830, %v831
    %v833 = vsel %vm823, %v716, -inf
    %v834 = vsel %vm823, %v721, -inf
    %v835 = vmax.f32 %v833, %v834
    %v836 = vrot.slane %v835, 4
    %v837 = vmax.f32 %v835, %v836
    %v838 = vrot.slane %v837, 2
    %v839 = vmax.f32 %v837, %v838
    %v840 = vrot.slane %v839, 1
    %v841 = vmax.f32 %v839, %v840
    %v842 = vmax.f32 %v832, %v813
    %v843 = vmax.f32 %v841, %v820
    %v844 = vlaneseq
    %v845 = vshrl.u32 %v844, 7
    %v846 = vsub.s32 0, %v845
    %v847 = vrot.slane %v842, %v846
    %v848 = vlaneseq
    %v849 = vshrl.u32 %v848, 7
    %v850 = vsub.s32 0, %v849
    %v851 = vrot.slane %v843, %v850
    %v852 = vsub.f32 %v706, %v847
    %v853 = vsub.f32 %v711, %v847
    %v854 = vsub.f32 %v716, %v851
    %v855 = vsub.f32 %v721, %v851
    %v856 = vmul.f32 %v852, 1.442695
    %v857 = vpow.pop %v856
    %v858 = vmul.f32 %v853, 1.442695
    %v859 = vpow.pop %v858
    %v860 = vmul.f32 %v854, 1.442695
    %v861 = vpow.pop %v860
    %v862 = vmul.f32 %v855, 1.442695
    %v863 = vpow.pop %v862
    %v864 = vsub.f32 %v813, %v842
    %v865 = vsub.f32 %v820, %v843
    %v866 = vmul.f32 %v864, 1.442695
    %v867 = vpow.pop %v866
    %v868 = vmul.f32 %v865, 1.442695
    %v869 = vpow.pop %v868
    %v870 = vsel %vm823, %v857, 0.0
    %v871 = vsel %vm823, %v859, 0.0
    %v872 = vadd.f32 %v870, %v871
    %v873 = vrot.slane %v872, 4
    %v874 = vadd.f32 %v872, %v873
    %v875 = vrot.slane %v874, 2
    %v876 = vadd.f32 %v874, %v875
    %v877 = vrot.slane %v876, 1
    %v878 = vadd.f32 %v876, %v877
    %v879 = vsel %vm823, %v861, 0.0
    %v880 = vsel %vm823, %v863, 0.0
    %v881 = vadd.f32 %v879, %v880
    %v882 = vrot.slane %v881, 4
    %v883 = vadd.f32 %v881, %v882
    %v884 = vrot.slane %v883, 2
    %v885 = vadd.f32 %v883, %v884
    %v886 = vrot.slane %v885, 1
    %v887 = vadd.f32 %v885, %v886
    %v888 = vadd.f32 %v867, %v878
    %v889 = vadd.f32 %v869, %v887
    %v890 = vrcp.pop %v888
    %v891 = vrcp.pop %v889
    %v894 = vlaneseq
    %v895 = vshrl.u32 %v894, 7
    %v896 = vsub.s32 0, %v895
    %v897 = vrot.slane %v890, %v896
    %v898 = vlaneseq
    %v899 = vshrl.u32 %v898, 7
    %v900 = vsub.s32 0, %v899
    %v901 = vrot.slane %v891, %v900
    %v904 = vmul.f32 %v857, %v897
    %v905 = vmul.f32 %v859, %v897
    %v906 = vmul.f32 %v861, %v901
    %v907 = vmul.f32 %v863, %v901
    %v908 = vmul.f32 %v867, %v890
    %v909 = vmul.f32 %v869, %v891
    %v911 = vsel %vm823, %v904, 0
    %v914 = vsel %vm823, %v905, 0
    %v917 = vsel %vm823, %v906, 0
    %v920 = vsel %vm823, %v907, 0
    %922 = vmatprep.subr.mxu0 0.0
    %923 = vmatpush1.msra.mxu0 %v589
    %924 = vmatprep.subr.mxu0 0.0
    %925 = vmatpush1.msra.mxu0 0.0
    %926 = vmatprep.subr.mxu0 0.0
    %927 = vmatpush1.msra.mxu0 0.0
    %928 = vmatprep.subr.mxu0 0.0
    %929 = vmatpush1.msra.mxu0 0.0
    %930 = vmatprep.subr.mxu0 0.0
    %931 = vmatpush1.msra.mxu0 0.0
    %932 = vmatprep.subr.mxu0 0.0
    %933 = vmatpush1.msra.mxu0 0.0
    %934 = vmatprep.subr.mxu0 0.0
    %935 = vmatpush1.msra.mxu0 0.0
    %936 = vmatprep.subr.mxu0 0.0
    %937 = vmatpush1.msra.mxu0 0.0
    %938 = vmatprep.subr.mxu0 0.0
    %939 = vmatpush1.msra.mxu0 0.0
    %940 = vmatprep.subr.mxu0 0.0
    %941 = vmatpush1.msra.mxu0 0.0
    %942 = vmatprep.subr.mxu0 0.0
    %943 = vmatpush1.msra.mxu0 0.0
    %944 = vmatprep.subr.mxu0 0.0
    %945 = vmatpush1.msra.mxu0 0.0
    %946 = vmatprep.subr.mxu0 0.0
    %947 = vmatpush1.msra.mxu0 0.0
    %948 = vmatprep.subr.mxu0 0.0
    %949 = vmatpush1.msra.mxu0 0.0
    %950 = vmatprep.subr.mxu0 0.0
    %951 = vmatpush1.msra.mxu0 0.0
    %952 = vmatprep.subr.mxu0 0.0
    %953 = vmatpush1.msra.mxu0 0.0
    %954 = vmatprep.subr.mxu0 0.0
    %955 = vmatpush1.msra.mxu0 0.0
    %956 = vmatprep.subr.mxu0 0.0
    %957 = vmatpush1.msra.mxu0 0.0
    %958 = vmatprep.subr.mxu0 0.0
    %959 = vmatpush1.msra.mxu0 0.0
    %960 = vmatprep.subr.mxu0 0.0
    %961 = vmatpush1.msra.mxu0 0.0
    %962 = vmatprep.subr.mxu0 0.0
    %963 = vmatpush1.msra.mxu0 0.0
    %964 = vmatprep.subr.mxu0 0.0
    %965 = vmatpush1.msra.mxu0 0.0
    %966 = vmatprep.subr.mxu0 0.0
    %967 = vmatpush1.msra.mxu0 0.0
    %968 = vmatprep.subr.mxu0 0.0
    %969 = vmatpush1.msra.mxu0 0.0
    %970 = vmatprep.subr.mxu0 0.0
    %971 = vmatpush1.msra.mxu0 0.0
    %972 = vmatprep.subr.mxu0 0.0
    %973 = vmatpush1.msra.mxu0 0.0
    %974 = vmatprep.subr.mxu0 0.0
    %975 = vmatpush1.msra.mxu0 0.0
    %976 = vmatprep.subr.mxu0 0.0
    %977 = vmatpush1.msra.mxu0 0.0
    %978 = vmatprep.subr.mxu0 0.0
    %979 = vmatpush1.msra.mxu0 0.0
    %980 = vmatprep.subr.mxu0 0.0
    %981 = vmatpush1.msra.mxu0 0.0
    %982 = vmatprep.subr.mxu0 0.0
    %983 = vmatpush1.msra.mxu0 0.0
    %984 = vmatprep.subr.mxu0 0.0
    %985 = vmatpush1.msra.mxu0 0.0
    %986 = vmatprep.mubr.f32.mxu0 0.0
    %987 = vmatmul.mubr.f32.gmra.mrb[0].mxu0 %v911
    %v988 = vpop.f32.mrb[0].mxu0
    %v989 = vadd.f32 0.0, %v988
    %v990 = vpop.f32.mrb[0].mxu0
    %991 = vmatprep.mubr.f32.mxu0 0.0
    %992 = vmatmul.mubr.f32.gmra.mrb[0].mxu0 %v914
    %v993 = vpop.f32.mrb[0].mxu0
    %v994 = vadd.f32 0.0, %v993
    %v995 = vpop.f32.mrb[0].mxu0
    %996 = vmatprep.mubr.f32.mxu0 0.0
    %997 = vmatmul.mubr.f32.gmra.mrb[0].mxu0 %v917
    %v998 = vpop.f32.mrb[0].mxu0
    %v999 = vadd.f32 0.0, %v998
    %v1000 = vpop.f32.mrb[0].mxu0
    %1001 = vmatprep.mubr.f32.mxu0 0.0
    %1002 = vmatmul.mubr.f32.gmra.mrb[0].mxu0 %v920
    %v1003 = vpop.f32.mrb[0].mxu0
    %v1004 = vadd.f32 0.0, %v1003
    %v1005 = vpop.f32.mrb[0].mxu0
    %1006 = vdwg.mxu0
    %v1009 = vcombine.low %v908, %v909
    %v1011 = vunpack.c.l.s4 1966171168
    %v1012 = vunpack.c.0.s8 %v1011
    %v1013 = vlaneseq
    %v1014 = vshrl.u32 %v1013, 7
    %v1015 = vsub.s32 %v1012, %v1014
    %v1016 = vrot.slane %v1009, %v1015
    %v1018 = vunpack.c.l.s4 1966171168
    %v1019 = vunpack.c.0.s8 %v1018
    %v1020 = vlaneseq
    %v1021 = vshrl.u32 %v1020, 7
    %v1022 = vsub.s32 %v1019, %v1021
    %v1023 = vrot.slane %v1016, %v1022
    %v1024 = vsel %vm823, %v1023, 0
    %1026 = vmatprep.subr.mxu0 0.0
    %1027 = vmatpush1.msra.mxu0 %v589
    %1028 = vmatprep.subr.mxu0 0.0
    %1029 = vmatpush1.msra.mxu0 0.0
    %1030 = vmatprep.subr.mxu0 0.0
    %1031 = vmatpush1.msra.mxu0 0.0
    %1032 = vmatprep.subr.mxu0 0.0
    %1033 = vmatpush1.msra.mxu0 0.0
    %1034 = vmatprep.subr.mxu0 0.0
    %1035 = vmatpush1.msra.mxu0 0.0
    %1036 = vmatprep.subr.mxu0 0.0
    %1037 = vmatpush1.msra.mxu0 0.0
    %1038 = vmatprep.subr.mxu0 0.0
    %1039 = vmatpush1.msra.mxu0 0.0
    %1040 = vmatprep.subr.mxu0 0.0
    %1041 = vmatpush1.msra.mxu0 0.0
    %1042 = vmatprep.subr.mxu0 0.0
    %1043 = vmatpush1.msra.mxu0 0.0
    %1044 = vmatprep.subr.mxu0 0.0
    %1045 = vmatpush1.msra.mxu0 0.0
    %1046 = vmatprep.subr.mxu0 0.0
    %1047 = vmatpush1.msra.mxu0 0.0
    %1048 = vmatprep.subr.mxu0 0.0
    %1049 = vmatpush1.msra.mxu0 0.0
    %1050 = vmatprep.subr.mxu0 0.0
    %1051 = vmatpush1.msra.mxu0 0.0
    %1052 = vmatprep.subr.mxu0 0.0
    %1053 = vmatpush1.msra.mxu0 0.0
    %1054 = vmatprep.subr.mxu0 0.0
    %1055 = vmatpush1.msra.mxu0 0.0
    %1056 = vmatprep.subr.mxu0 0.0
    %1057 = vmatpush1.msra.mxu0 0.0
    %1058 = vmatprep.subr.mxu0 0.0
    %1059 = vmatpush1.msra.mxu0 0.0
    %1060 = vmatprep.subr.mxu0 0.0
    %1061 = vmatpush1.msra.mxu0 0.0
    %1062 = vmatprep.subr.mxu0 0.0
    %1063 = vmatpush1.msra.mxu0 0.0
    %1064 = vmatprep.subr.mxu0 0.0
    %1065 = vmatpush1.msra.mxu0 0.0
    %1066 = vmatprep.subr.mxu0 0.0
    %1067 = vmatpush1.msra.mxu0 0.0
    %1068 = vmatprep.subr.mxu0 0.0
    %1069 = vmatpush1.msra.mxu0 0.0
    %1070 = vmatprep.subr.mxu0 0.0
    %1071 = vmatpush1.msra.mxu0 0.0
    %1072 = vmatprep.subr.mxu0 0.0
    %1073 = vmatpush1.msra.mxu0 0.0
    %1074 = vmatprep.subr.mxu0 0.0
    %1075 = vmatpush1.msra.mxu0 0.0
    %1076 = vmatprep.subr.mxu0 0.0
    %1077 = vmatpush1.msra.mxu0 0.0
    %1078 = vmatprep.subr.mxu0 0.0
    %1079 = vmatpush1.msra.mxu0 0.0
    %1080 = vmatprep.subr.mxu0 0.0
    %1081 = vmatpush1.msra.mxu0 0.0
    %1082 = vmatprep.subr.mxu0 0.0
    %1083 = vmatpush1.msra.mxu0 0.0
    %1084 = vmatprep.subr.mxu0 0.0
    %1085 = vmatpush1.msra.mxu0 0.0
    %1086 = vmatprep.subr.mxu0 0.0
    %1087 = vmatpush1.msra.mxu0 0.0
    %1088 = vmatprep.subr.mxu0 0.0
    %1089 = vmatpush1.msra.mxu0 0.0
    %1090 = vmatprep.mubr.f32.mxu0 0.0
    %1091 = vmatmul.mubr.f32.gmra.mrb[0].mxu0 %v1024
    %v1092 = vpop.f32.mrb[0].mxu0
    %v1093 = vadd.f32 0.0, %v1092
    %v1094 = vpop.f32.mrb[0].mxu0
    %1095 = vdwg.mxu0
    %v1096 = vmul.f32 %v989, %v567
    %v1097 = vmul.f32 %v994, %v572
    %v1098 = vmul.f32 %v999, %v577
    %v1099 = vmul.f32 %v1004, %v582
    %v1100 = vsel %vm115, %v1096, 0.0
    %v1101 = vsel %vm115, %v1097, 0.0
    %v1102 = vadd.f32 %v1100, %v1101
    %v1103 = vrot.slane %v1102, 4
    %v1104 = vadd.f32 %v1102, %v1103
    %v1105 = vrot.slane %v1104, 2
    %v1106 = vadd.f32 %v1104, %v1105
    %v1107 = vrot.slane %v1106, 1
    %v1108 = vadd.f32 %v1106, %v1107
    %v1109 = vsel %vm115, %v1098, 0.0
    %v1110 = vsel %vm115, %v1099, 0.0
    %v1111 = vadd.f32 %v1109, %v1110
    %v1112 = vrot.slane %v1111, 4
    %v1113 = vadd.f32 %v1111, %v1112
    %v1114 = vrot.slane %v1113, 2
    %v1115 = vadd.f32 %v1113, %v1114
    %v1116 = vrot.slane %v1115, 1
    %v1117 = vadd.f32 %v1115, %v1116
    %v1118 = vmul.f32 %v1093, %v400
    %v1120 = vrot.slane %v1118, 1
    %v1123 = vadd.f32 %v1108, %v1118
    %v1124 = vadd.f32 %v1117, %v1120
    %v1125 = vld [vmem:[#allocation10] sm:$0xff]
    %v1126 = vld [vmem:[#allocation10 + $0x8] sm:$0xff]
    %v1127 = vld [vmem:[#allocation10 + $0x10] sm:$0xff]
    %v1128 = vld [vmem:[#allocation10 + $0x18] sm:$0xff]
    %v1129 = vld [vmem:[%s12] sm:$0x1]
    %v1131 = vlaneseq
    %v1132 = vshrl.u32 %v1131, 7
    %v1133 = vsub.s32 0, %v1132
    %v1134 = vrot.slane %v1129, %v1133
    %v1138 = vrot.slane %v1124, 7
    %v1139 = vsel %vm166, %v1138, %v1123
    %v1140 = vsel %vm115, %v1139, 0
    %1142 = vmatprep.subr.mxu0 0.0
    %1143 = vmatpush1.msra.mxu0 %v1125
    %1144 = vmatprep.subr.mxu0 0.0
    %1145 = vmatpush1.msra.mxu0 %v1126
    %1146 = vmatprep.subr.mxu0 0.0
    %1147 = vmatpush1.msra.mxu0 %v1127
    %1148 = vmatprep.subr.mxu0 0.0
    %1149 = vmatpush1.msra.mxu0 %v1128
    %1150 = vmatprep.subr.mxu0 0.0
    %1151 = vmatpush1.msra.mxu0 0.0
    %1152 = vmatprep.subr.mxu0 0.0
    %1153 = vmatpush1.msra.mxu0 0.0
    %1154 = vmatprep.subr.mxu0 0.0
    %1155 = vmatpush1.msra.mxu0 0.0
    %1156 = vmatprep.subr.mxu0 0.0
    %1157 = vmatpush1.msra.mxu0 0.0
    %1158 = vmatprep.subr.mxu0 0.0
    %1159 = vmatpush1.msra.mxu0 0.0
    %1160 = vmatprep.subr.mxu0 0.0
    %1161 = vmatpush1.msra.mxu0 0.0
    %1162 = vmatprep.subr.mxu0 0.0
    %1163 = vmatpush1.msra.mxu0 0.0
    %1164 = vmatprep.subr.mxu0 0.0
    %1165 = vmatpush1.msra.mxu0 0.0
    %1166 = vmatprep.subr.mxu0 0.0
    %1167 = vmatpush1.msra.mxu0 0.0
    %1168 = vmatprep.subr.mxu0 0.0
    %1169 = vmatpush1.msra.mxu0 0.0
    %1170 = vmatprep.subr.mxu0 0.0
    %1171 = vmatpush1.msra.mxu0 0.0
    %1172 = vmatprep.subr.mxu0 0.0
    %1173 = vmatpush1.msra.mxu0 0.0
    %1174 = vmatprep.subr.mxu0 0.0
    %1175 = vmatpush1.msra.mxu0 0.0
    %1176 = vmatprep.subr.mxu0 0.0
    %1177 = vmatpush1.msra.mxu0 0.0
    %1178 = vmatprep.subr.mxu0 0.0
    %1179 = vmatpush1.msra.mxu0 0.0
    %1180 = vmatprep.subr.mxu0 0.0
    %1181 = vmatpush1.msra.mxu0 0.0
    %1182 = vmatprep.subr.mxu0 0.0
    %1183 = vmatpush1.msra.mxu0 0.0
    %1184 = vmatprep.subr.mxu0 0.0
    %1185 = vmatpush1.msra.mxu0 0.0
    %1186 = vmatprep.subr.mxu0 0.0
    %1187 = vmatpush1.msra.mxu0 0.0
    %1188 = vmatprep.subr.mxu0 0.0
    %1189 = vmatpush1.msra.mxu0 0.0
    %1190 = vmatprep.subr.mxu0 0.0
    %1191 = vmatpush1.msra.mxu0 0.0
    %1192 = vmatprep.subr.mxu0 0.0
    %1193 = vmatpush1.msra.mxu0 0.0
    %1194 = vmatprep.subr.mxu0 0.0
    %1195 = vmatpush1.msra.mxu0 0.0
    %1196 = vmatprep.subr.mxu0 0.0
    %1197 = vmatpush1.msra.mxu0 0.0
    %1198 = vmatprep.subr.mxu0 0.0
    %1199 = vmatpush1.msra.mxu0 0.0
    %1200 = vmatprep.subr.mxu0 0.0
    %1201 = vmatpush1.msra.mxu0 0.0
    %1202 = vmatprep.subr.mxu0 0.0
    %1203 = vmatpush1.msra.mxu0 0.0
    %1204 = vmatprep.subr.mxu0 0.0
    %1205 = vmatpush1.msra.mxu0 0.0
    %1206 = vmatprep.mubr.f32.mxu0 0.0
    %1207 = vmatmul.mubr.f32.gmra.mrb[0].mxu0 %v1140
    %v1208 = vpop.f32.mrb[0].mxu0
    %v1209 = vadd.f32 %v1134, %v1208
    %v1210 = vpop.f32.mrb[0].mxu0
    %1211 = vdwg.mxu0
    %1212 = vst [vmem:[#allocation11] sm:$0x3] %v1209
    // Predicated region
    $region74: #{tpu_custom_call.1} parent=1 // pred_check
      _
    $region75: #{tpu_custom_call.1} parent=1 // pred_check_branch
      %1214 = sbr.rel (0) target = $region77
    $region76: #{tpu_custom_call.1} parent=1 // pred_region
      %s1216 = ssub.s32 32, 32
      %1217 = vsyncadd [#allocation4], %s1216
      %s1219 = sshll.u32 [#allocation11], 4
      %s1220 = int_to_ptr.vmem [resolvable:$true] %s1219
      %1222 = dma.vmem_to_hbm [thread:$0]  %s1220, 32, %s13, [#allocation4]
    $region77: #{tpu_custom_call.1} parent=1 // pred_fallthru
      _
    // Predicated region
    $region78: #{tpu_custom_call.1} parent=1 // pred_check
      _
    $region79: #{tpu_custom_call.1} parent=1 // pred_check_branch
      %1224 = sbr.rel (0) target = $region81
    $region80: #{tpu_custom_call.1} parent=1 // pred_region
      %1225 = dma.done [#allocation4], 32
    $region81: #{tpu_custom_call.1} parent=1 // pred_fallthru
      _
    %1226 = vsyncpa [#allocation3], 1
    %1227 = vsyncpa [#allocation6], 1
    %1228 = vsyncpa [#allocation9], 1
    %1229 = vsyncpa [#allocation4], 1

</llo_original>
